<compile_context>
chip_gen: v7x
topology: tpu7x:2x2x1
jax: 0.10.0
libtpu: 0.0.40
codegen_flags: <defaults>
</compile_context>

<pallas_src>
import math

import jax
import jax.numpy as jnp
from jax.experimental import pallas as pl
from jax.experimental.pallas import tpu as pltpu

# ----------------------------- model hyper-params ---------------------------
B = 2            # batch
C = 4            # nb input channels   (input_shape[1])
T = 32           # timesamples         (input_shape[0])
OUT_DIM = 2      # output_shape[1]
F = 8            # nb_filters
DEPTH = 6        # depth (multiple of 3 -> DEPTH//3 residual shortcuts)
P = 5            # nb_outlayer_channels
K = 9            # kernel_size
USE_RESIDUAL = True
N_SC = DEPTH // 3
LP = math.ceil((K - 1) / 2)      # Pad_Conv left pad
RP = (K - 1) // 2                # Pad_Conv right pad
KF = K * F                       # im2col contraction depth
EPS = 1e-5                       # BatchNorm eps
LANES = 128                      # lane-aligned fused working width
SLOT = LANES // B                # per-sample lane slot
NL = DEPTH + N_SC + 1            # conv layers packed into the weight slab

assert C <= F and P <= F
assert LANES % B == 0 and (SLOT & (SLOT - 1)) == 0          # slot is a pow2
assert SLOT >= LP + T + RP + 1   # conv/pool windows never cross sample slots


# --------------------------------- kernel -----------------------------------
def resconv_kernel(x_ref, w_ref, b_ref, wl_ref, out_ref):
    # Validity mask built in-kernel (no operand): lane j is valid iff
    # (j mod SLOT) in [LP, LP+T).  All invalid lanes of the activation are kept
    # at exactly zero so the im2col conv padding and Pad_Pool(value=0) hold.
    col = jax.lax.broadcasted_iota(jnp.int32, (F, LANES), 1)
    cm = col & (SLOT - 1)
    valid = (cm >= LP) & (cm < LP + T)

    def msk(v):
        return jnp.where(valid, v, 0.0)

    def shifted(v, dk):
        # v[:, j + dk] via circular lane rotation; wrap lanes only pollute
        # invalid columns, which are always re-masked afterwards.
        if dk == 0:
            return v
        return pltpu.roll(v, (-dk) % LANES, axis=1)

    def conv_same(idx, y):
        # Pad_Conv + Conv1d(+folded BN scale) as ONE im2col MXU matmul:
        # (F, K*F) @ (K*F, LANES); slab k of the operand is y shifted by k-LP.
        xk = jnp.concatenate([shifted(y, k - LP) for k in range(K)], axis=0)
        return jnp.dot(w_ref[idx], xk, preferred_element_type=jnp.float32)

    y = x_ref[...]                     # (F, 128), zero outside valid lanes
    res = y
    sc = 0
    for d in range(DEPTH):
        # Conv1d(bias=False) + folded BN + ReLU  (post-conv mask is required:
        # it keeps the inter-sample padding columns at exactly zero)
        y = msk(jnp.maximum(conv_same(d, y) + b_ref[d], 0.0))
        # Pad_Pool(left=0, right=1, value=0) + MaxPool1d(k=2, s=1): y >= 0 and
        # the column right of each sample is zero, so one rolled max suffices.
        y = jnp.maximum(y, shifted(y, 1))
        if USE_RESIDUAL and d % 3 == 2:
            r = conv_same(DEPTH + sc, res) + b_ref[DEPTH + sc]   # shortcut
            y = msk(jnp.maximum(y + r, 0.0))
            res = y
            sc += 1
        else:
            y = msk(y)                 # kill the one pool-polluted pad column

    # gap_layer: Pad_Pool(right=1, value=0) + AvgPool1d(k=2, s=1)
    g = 0.5 * (y + shifted(y, 1))

    # output_layer: Conv1d(k=1) + folded BN + ReLU + Pad_Pool + MaxPool(2, 1)
    wout = w_ref[NL - 1][:, :F]        # 1x1 conv weights live in lanes [0, F)
    z = jnp.dot(wout, g, preferred_element_type=jnp.float32)
    z = msk(jnp.maximum(z + b_ref[NL - 1], 0.0))
    z = jnp.maximum(z, shifted(z, 1))

    # out_linear restricted to output column 0 (module returns output[:,:,0]);
    # wl is zero on every non-valid lane, so junk columns contribute nothing.
    out_ref[...] = jnp.dot(z, wl_ref[...], preferred_element_type=jnp.float32)


# ------------------------------ params & packing ----------------------------
def make_params(key):
    keys = iter(jax.random.split(key, 64))

    def nrm(shape, s=0.1):
        return s * jax.random.normal(next(keys), shape, jnp.float32)

    def unif(shape, lo, hi):
        return jax.random.uniform(next(keys), shape, jnp.float32, lo, hi)

    def bn_fold(n):
        gamma = unif((n,), 0.8, 1.2)
        beta = nrm((n,), 0.05)
        mean = nrm((n,), 0.05)
        var = unif((n,), 0.5, 1.5)
        scale = gamma / jnp.sqrt(var + EPS)
        bias = beta - mean * scale
        return scale, bias

    wblk, sblk, bblk = [], [], []
    for d in range(DEPTH):
        cin = C if d == 0 else F
        wblk.append(nrm((F, cin, K)))
        s, b = bn_fold(F)
        sblk.append(s)
        bblk.append(b)

    wsc, ssc, bsc = [], [], []
    for s_idx in range(N_SC):
        cin = C if s_idx == 0 else F
        w = nrm((F, cin, K))
        cb = nrm((F,), 0.05)
        s, b = bn_fold(F)
        wsc.append(w)
        ssc.append(s)
        bsc.append(b + s * cb)           # fold shortcut conv bias into BN bias

    wout = nrm((P, F))
    cbout = nrm((P,), 0.05)
    sout, bout = bn_fold(P)
    bout = bout + sout * cbout           # fold output conv bias

    wlin = nrm((OUT_DIM, T))
    blin = nrm((OUT_DIM,), 0.05)

    return dict(wblk=wblk, sblk=jnp.stack(sblk), bblk=jnp.stack(bblk),
                wsc=wsc, ssc=jnp.stack(ssc), bsc=jnp.stack(bsc),
                wout=wout, sout=sout, bout=bout, wlin=wlin, blin=blin)


def pack_for_kernel(p):
    """One-time weight packing (BN scales folded into conv weights)."""
    def flat_w(w, scale):
        # (F, cin, K) -> (F, K*F): row index k*F + c holds scale[f]*w[f, c, k];
        # input channels zero-padded to F to match the fused layout.
        w = w * scale[:, None, None]
        wpad = jnp.pad(w, ((0, 0), (0, F - w.shape[1]), (0, 0)))
        return jnp.transpose(wpad, (0, 2, 1)).reshape(F, KF)

    wslab, bslab = [], []
    for d in range(DEPTH):
        wslab.append(flat_w(p['wblk'][d], p['sblk'][d]))
        bslab.append(p['bblk'][d])
    for s in range(N_SC):
        wslab.append(flat_w(p['wsc'][s], p['ssc'][s]))
        bslab.append(p['bsc'][s])
    # output 1x1 conv: fold sout, pad P->F rows, park it in lanes [0, F)
    wout = jnp.pad(p['wout'] * p['sout'][:, None], ((0, F - P), (0, 0)))
    wslab.append(jnp.pad(wout, ((0, 0), (0, KF - F))))
    bslab.append(jnp.pad(p['bout'], (0, F - P)))

    wslab = jnp.stack(wslab)                      # (NL, F, K*F)
    bslab = jnp.stack(bslab)[:, :, None]          # (NL, F, 1)

    # out_linear column 0 weights scattered onto each sample's valid lanes.
    wl = jnp.zeros((LANES, B), jnp.float32)
    for b in range(B):
        wl = wl.at[b * SLOT + LP:b * SLOT + LP + T, b].set(p['wlin'][0])
    return wslab, bslab, wl


def _forward_impl(x4, wslab, bslab, wl, blin0):
    x = x4[:, :, 0, :]                                        # (B, C, T)
    # Pack both samples into the lane-aligned fused layout (zeros elsewhere).
    xp = jnp.pad(x, ((0, 0), (0, F - C), (LP, SLOT - LP - T)))  # (B, F, SLOT)
    xbuf = jnp.transpose(xp, (1, 0, 2)).reshape(F, LANES)       # (F, 128)

    out = pl.pallas_call(
        resconv_kernel,
        out_shape=jax.ShapeDtypeStruct((F, B), jnp.float32),
        grid=(1,),
        in_specs=[
            pl.BlockSpec((F, LANES), lambda i: (0, 0)),
            pl.BlockSpec((NL, F, KF), lambda i: (0, 0, 0)),
            pl.BlockSpec((NL, F, 1), lambda i: (0, 0, 0)),
            pl.BlockSpec((LANES, B), lambda i: (0, 0)),
        ],
        out_specs=pl.BlockSpec((F, B), lambda i: (0, 0)),
        compiler_params=pltpu.CompilerParams(dimension_semantics=("arbitrary",)),
    )(xbuf, wslab, bslab, wl)

    # rows >= P come from zero-padded output-conv rows (all zero); slice+add.
    return out[:P, :].T + blin0                               # (B, P)


resconv_forward = jax.jit(_forward_impl)


# ---------------------------- plain-JAX reference ----------------------------
def _conv1d_same(x, w):                  # x (B, Cin, T), w (Cout, Cin, K)
    xp = jnp.pad(x, ((0, 0), (0, 0), (LP, RP)))
    return jax.lax.conv_general_dilated(xp, w, (1,), 'VALID',
                                        dimension_numbers=('NCH', 'OIH', 'NCH'))


def _maxpool_pad(x):
    xp = jnp.pad(x, ((0, 0), (0, 0), (0, 1)))
    return jnp.maximum(xp[..., :-1], xp[..., 1:])


def _avgpool_pad(x):
    xp = jnp.pad(x, ((0, 0), (0, 0), (0, 1)))
    return 0.5 * (xp[..., :-1] + xp[..., 1:])


def reference(x4, p):
    x = x4[:, :, 0, :]
    inp = x
    cnt = 0
    for d in range(DEPTH):
        y = _conv1d_same(x, p['wblk'][d])
        y = jnp.maximum(y * p['sblk'][d][None, :, None]
                        + p['bblk'][d][None, :, None], 0.0)
        y = _maxpool_pad(y)
        if USE_RESIDUAL and d % 3 == 2:
            r = _conv1d_same(inp, p['wsc'][cnt])
            r = r * p['ssc'][cnt][None, :, None] + p['bsc'][cnt][None, :, None]
            y = jnp.maximum(y + r, 0.0)
            inp = y
            cnt += 1
        x = y
    g = _avgpool_pad(x)
    z = jnp.einsum('pf,bft->bpt', p['wout'], g)
    z = jnp.maximum(z * p['sout'][None, :, None] + p['bout'][None, :, None], 0.0)
    z = _maxpool_pad(z)
    lin = jnp.einsum('bpt,jt->bpj', z, p['wlin']) + p['blin'][None, None, :]
    return lin[:, :, 0]


# ----------------------------------- main ------------------------------------
if __name__ == "__main__":
    key = jax.random.PRNGKey(0)
    kx, kp = jax.random.split(key)
    x4 = jax.random.normal(kx, (B, C, 1, T), dtype=jnp.float32)
    params = make_params(kp)

    # One-time packing (static across calls); per-call path is one jitted fn.
    wslab, bslab, wl = pack_for_kernel(params)
    blin0 = params['blin'][0]

    out = resconv_forward(x4, wslab, bslab, wl, blin0)
    out = jax.block_until_ready(out)
    assert out.shape == (B, P), out.shape

    ref = jax.block_until_ready(reference(x4, params))
    err = float(jnp.max(jnp.abs(out - ref)))
    assert bool(jnp.all(jnp.isfinite(out))) and err < 2e-3, f"max abs err {err}"

    print("KERNEL_OK")
</pallas_src>

<mosaic_0001>
module attributes {stable_mosaic.version = 11 : i64} {
  func.func @resconv_kernel(%arg0: i32, %arg1: memref<8x128xf32, #tpu.memory_space<vmem>>, %arg2: memref<9x8x72xf32, #tpu.memory_space<vmem>>, %arg3: memref<9x8x1xf32, #tpu.memory_space<vmem>>, %arg4: memref<128x2xf32, #tpu.memory_space<vmem>>, %arg5: memref<8x2xf32, #tpu.memory_space<vmem>>) attributes {dimension_semantics = [#tpu.dimension_semantics<arbitrary>], iteration_bounds = array<i64: 1>, scalar_prefetch = 0 : i64, scratch_operands = 0 : i64, tpu.core_type = #tpu.core_type<tc>, window_params = [{pipeline_mode = #tpu.pipeline_mode<synchronous>, transform_indices = @transform_0, window_bounds = array<i64: 8, 128>}, {pipeline_mode = #tpu.pipeline_mode<synchronous>, transform_indices = @transform_1, window_bounds = array<i64: 9, 8, 72>}, {pipeline_mode = #tpu.pipeline_mode<synchronous>, transform_indices = @transform_2, window_bounds = array<i64: 9, 8, 1>}, {pipeline_mode = #tpu.pipeline_mode<synchronous>, transform_indices = @transform_3, window_bounds = array<i64: 128, 2>}, {pipeline_mode = #tpu.pipeline_mode<synchronous>, transform_indices = @transform_4, window_bounds = array<i64: 8, 2>}]} {
    %0 = tpu.iota {dimensions = array<i32: 1>} : vector<8x128xi32>
    %c63_i32 = arith.constant 63 : i32
    %1 = vector.broadcast %c63_i32 : i32 to vector<8x128xi32>
    %2 = arith.andi %0, %1 : vector<8x128xi32>
    %c4_i32 = arith.constant 4 : i32
    %3 = vector.broadcast %c4_i32 : i32 to vector<8x128xi32>
    %4 = arith.cmpi sge, %2, %3 : vector<8x128xi32>
    %c36_i32 = arith.constant 36 : i32
    %5 = vector.broadcast %c36_i32 : i32 to vector<8x128xi32>
    %6 = arith.cmpi slt, %2, %5 : vector<8x128xi32>
    %7 = arith.andi %4, %6 : vector<8x128xi1>
    %c0 = arith.constant 0 : index
    %c0_0 = arith.constant 0 : index
    %8 = vector.load %arg1[%c0, %c0_0] : memref<8x128xf32, #tpu.memory_space<vmem>>, vector<8x128xf32>
    %c4_i32_1 = arith.constant 4 : i32
    %9 = tpu.dynamic_rotate %8 by %c4_i32_1 dim 1 : vector<8x128xf32>, i32 -> vector<8x128xf32>
    %c3_i32 = arith.constant 3 : i32
    %10 = tpu.dynamic_rotate %8 by %c3_i32 dim 1 : vector<8x128xf32>, i32 -> vector<8x128xf32>
    %c2_i32 = arith.constant 2 : i32
    %11 = tpu.dynamic_rotate %8 by %c2_i32 dim 1 : vector<8x128xf32>, i32 -> vector<8x128xf32>
    %c1_i32 = arith.constant 1 : i32
    %12 = tpu.dynamic_rotate %8 by %c1_i32 dim 1 : vector<8x128xf32>, i32 -> vector<8x128xf32>
    %c127_i32 = arith.constant 127 : i32
    %13 = tpu.dynamic_rotate %8 by %c127_i32 dim 1 : vector<8x128xf32>, i32 -> vector<8x128xf32>
    %c126_i32 = arith.constant 126 : i32
    %14 = tpu.dynamic_rotate %8 by %c126_i32 dim 1 : vector<8x128xf32>, i32 -> vector<8x128xf32>
    %c125_i32 = arith.constant 125 : i32
    %15 = tpu.dynamic_rotate %8 by %c125_i32 dim 1 : vector<8x128xf32>, i32 -> vector<8x128xf32>
    %c124_i32 = arith.constant 124 : i32
    %16 = tpu.dynamic_rotate %8 by %c124_i32 dim 1 : vector<8x128xf32>, i32 -> vector<8x128xf32>
    %17 = tpu.concatenate %9, %10, %11, %12, %8, %13, %14, %15, %16 in 0 : vector<8x128xf32>, vector<8x128xf32>, vector<8x128xf32>, vector<8x128xf32>, vector<8x128xf32>, vector<8x128xf32>, vector<8x128xf32>, vector<8x128xf32>, vector<8x128xf32> -> vector<72x128xf32>
    %c0_2 = arith.constant 0 : index
    %c0_3 = arith.constant 0 : index
    %c0_4 = arith.constant 0 : index
    %18 = vector.load %arg2[%c0_2, %c0_3, %c0_4] : memref<9x8x72xf32, #tpu.memory_space<vmem>>, vector<1x8x72xf32>
    %19 = vector.shape_cast %18 : vector<1x8x72xf32> to vector<8x72xf32>
    %cst = arith.constant dense<0.000000e+00> : vector<8x128xf32>
    %20 = tpu.matmul %19, %17, %cst {dimension_numbers = #tpu.dot_dimension_numbers<[1], [0], [0], [1], [0, 0, 1, 1], [], []>} : vector<8x72xf32>, vector<72x128xf32>, vector<8x128xf32> -> vector<8x128xf32>
    %c0_5 = arith.constant 0 : index
    %c0_6 = arith.constant 0 : index
    %c0_7 = arith.constant 0 : index
    %21 = vector.load %arg3[%c0_5, %c0_6, %c0_7] : memref<9x8x1xf32, #tpu.memory_space<vmem>>, vector<1x8x1xf32>
    %22 = vector.shape_cast %21 : vector<1x8x1xf32> to vector<8x1xf32>
    %23 = vector.broadcast %22 : vector<8x1xf32> to vector<8x128xf32>
    %24 = arith.addf %20, %23 : vector<8x128xf32>
    %cst_8 = arith.constant 0.000000e+00 : f32
    %25 = vector.broadcast %cst_8 : f32 to vector<8x128xf32>
    %26 = arith.maximumf %24, %25 : vector<8x128xf32>
    %cst_9 = arith.constant 0.000000e+00 : f32
    %27 = vector.broadcast %cst_9 : f32 to vector<8x128xf32>
    %28 = arith.select %7, %26, %27 : vector<8x128xi1>, vector<8x128xf32>
    %c127_i32_10 = arith.constant 127 : i32
    %29 = tpu.dynamic_rotate %28 by %c127_i32_10 dim 1 : vector<8x128xf32>, i32 -> vector<8x128xf32>
    %30 = arith.maximumf %28, %29 : vector<8x128xf32>
    %cst_11 = arith.constant 0.000000e+00 : f32
    %31 = vector.broadcast %cst_11 : f32 to vector<8x128xf32>
    %32 = arith.select %7, %30, %31 : vector<8x128xi1>, vector<8x128xf32>
    %c4_i32_12 = arith.constant 4 : i32
    %33 = tpu.dynamic_rotate %32 by %c4_i32_12 dim 1 : vector<8x128xf32>, i32 -> vector<8x128xf32>
    %c3_i32_13 = arith.constant 3 : i32
    %34 = tpu.dynamic_rotate %32 by %c3_i32_13 dim 1 : vector<8x128xf32>, i32 -> vector<8x128xf32>
    %c2_i32_14 = arith.constant 2 : i32
    %35 = tpu.dynamic_rotate %32 by %c2_i32_14 dim 1 : vector<8x128xf32>, i32 -> vector<8x128xf32>
    %c1_i32_15 = arith.constant 1 : i32
    %36 = tpu.dynamic_rotate %32 by %c1_i32_15 dim 1 : vector<8x128xf32>, i32 -> vector<8x128xf32>
    %c127_i32_16 = arith.constant 127 : i32
    %37 = tpu.dynamic_rotate %32 by %c127_i32_16 dim 1 : vector<8x128xf32>, i32 -> vector<8x128xf32>
    %c126_i32_17 = arith.constant 126 : i32
    %38 = tpu.dynamic_rotate %32 by %c126_i32_17 dim 1 : vector<8x128xf32>, i32 -> vector<8x128xf32>
    %c125_i32_18 = arith.constant 125 : i32
    %39 = tpu.dynamic_rotate %32 by %c125_i32_18 dim 1 : vector<8x128xf32>, i32 -> vector<8x128xf32>
    %c124_i32_19 = arith.constant 124 : i32
    %40 = tpu.dynamic_rotate %32 by %c124_i32_19 dim 1 : vector<8x128xf32>, i32 -> vector<8x128xf32>
    %41 = tpu.concatenate %33, %34, %35, %36, %32, %37, %38, %39, %40 in 0 : vector<8x128xf32>, vector<8x128xf32>, vector<8x128xf32>, vector<8x128xf32>, vector<8x128xf32>, vector<8x128xf32>, vector<8x128xf32>, vector<8x128xf32>, vector<8x128xf32> -> vector<72x128xf32>
    %c1 = arith.constant 1 : index
    %c0_20 = arith.constant 0 : index
    %c0_21 = arith.constant 0 : index
    %42 = vector.load %arg2[%c1, %c0_20, %c0_21] : memref<9x8x72xf32, #tpu.memory_space<vmem>>, vector<1x8x72xf32>
    %43 = vector.shape_cast %42 : vector<1x8x72xf32> to vector<8x72xf32>
    %cst_22 = arith.constant dense<0.000000e+00> : vector<8x128xf32>
    %44 = tpu.matmul %43, %41, %cst_22 {dimension_numbers = #tpu.dot_dimension_numbers<[1], [0], [0], [1], [0, 0, 1, 1], [], []>} : vector<8x72xf32>, vector<72x128xf32>, vector<8x128xf32> -> vector<8x128xf32>
    %c1_23 = arith.constant 1 : index
    %c0_24 = arith.constant 0 : index
    %c0_25 = arith.constant 0 : index
    %45 = vector.load %arg3[%c1_23, %c0_24, %c0_25] : memref<9x8x1xf32, #tpu.memory_space<vmem>>, vector<1x8x1xf32>
    %46 = vector.shape_cast %45 : vector<1x8x1xf32> to vector<8x1xf32>
    %47 = vector.broadcast %46 : vector<8x1xf32> to vector<8x128xf32>
    %48 = arith.addf %44, %47 : vector<8x128xf32>
    %cst_26 = arith.constant 0.000000e+00 : f32
    %49 = vector.broadcast %cst_26 : f32 to vector<8x128xf32>
    %50 = arith.maximumf %48, %49 : vector<8x128xf32>
    %cst_27 = arith.constant 0.000000e+00 : f32
    %51 = vector.broadcast %cst_27 : f32 to vector<8x128xf32>
    %52 = arith.select %7, %50, %51 : vector<8x128xi1>, vector<8x128xf32>
    %c127_i32_28 = arith.constant 127 : i32
    %53 = tpu.dynamic_rotate %52 by %c127_i32_28 dim 1 : vector<8x128xf32>, i32 -> vector<8x128xf32>
    %54 = arith.maximumf %52, %53 : vector<8x128xf32>
    %cst_29 = arith.constant 0.000000e+00 : f32
    %55 = vector.broadcast %cst_29 : f32 to vector<8x128xf32>
    %56 = arith.select %7, %54, %55 : vector<8x128xi1>, vector<8x128xf32>
    %c4_i32_30 = arith.constant 4 : i32
    %57 = tpu.dynamic_rotate %56 by %c4_i32_30 dim 1 : vector<8x128xf32>, i32 -> vector<8x128xf32>
    %c3_i32_31 = arith.constant 3 : i32
    %58 = tpu.dynamic_rotate %56 by %c3_i32_31 dim 1 : vector<8x128xf32>, i32 -> vector<8x128xf32>
    %c2_i32_32 = arith.constant 2 : i32
    %59 = tpu.dynamic_rotate %56 by %c2_i32_32 dim 1 : vector<8x128xf32>, i32 -> vector<8x128xf32>
    %c1_i32_33 = arith.constant 1 : i32
    %60 = tpu.dynamic_rotate %56 by %c1_i32_33 dim 1 : vector<8x128xf32>, i32 -> vector<8x128xf32>
    %c127_i32_34 = arith.constant 127 : i32
    %61 = tpu.dynamic_rotate %56 by %c127_i32_34 dim 1 : vector<8x128xf32>, i32 -> vector<8x128xf32>
    %c126_i32_35 = arith.constant 126 : i32
    %62 = tpu.dynamic_rotate %56 by %c126_i32_35 dim 1 : vector<8x128xf32>, i32 -> vector<8x128xf32>
    %c125_i32_36 = arith.constant 125 : i32
    %63 = tpu.dynamic_rotate %56 by %c125_i32_36 dim 1 : vector<8x128xf32>, i32 -> vector<8x128xf32>
    %c124_i32_37 = arith.constant 124 : i32
    %64 = tpu.dynamic_rotate %56 by %c124_i32_37 dim 1 : vector<8x128xf32>, i32 -> vector<8x128xf32>
    %65 = tpu.concatenate %57, %58, %59, %60, %56, %61, %62, %63, %64 in 0 : vector<8x128xf32>, vector<8x128xf32>, vector<8x128xf32>, vector<8x128xf32>, vector<8x128xf32>, vector<8x128xf32>, vector<8x128xf32>, vector<8x128xf32>, vector<8x128xf32> -> vector<72x128xf32>
    %c2 = arith.constant 2 : index
    %c0_38 = arith.constant 0 : index
    %c0_39 = arith.constant 0 : index
    %66 = vector.load %arg2[%c2, %c0_38, %c0_39] : memref<9x8x72xf32, #tpu.memory_space<vmem>>, vector<1x8x72xf32>
    %67 = vector.shape_cast %66 : vector<1x8x72xf32> to vector<8x72xf32>
    %cst_40 = arith.constant dense<0.000000e+00> : vector<8x128xf32>
    %68 = tpu.matmul %67, %65, %cst_40 {dimension_numbers = #tpu.dot_dimension_numbers<[1], [0], [0], [1], [0, 0, 1, 1], [], []>} : vector<8x72xf32>, vector<72x128xf32>, vector<8x128xf32> -> vector<8x128xf32>
    %c2_41 = arith.constant 2 : index
    %c0_42 = arith.constant 0 : index
    %c0_43 = arith.constant 0 : index
    %69 = vector.load %arg3[%c2_41, %c0_42, %c0_43] : memref<9x8x1xf32, #tpu.memory_space<vmem>>, vector<1x8x1xf32>
    %70 = vector.shape_cast %69 : vector<1x8x1xf32> to vector<8x1xf32>
    %71 = vector.broadcast %70 : vector<8x1xf32> to vector<8x128xf32>
    %72 = arith.addf %68, %71 : vector<8x128xf32>
    %cst_44 = arith.constant 0.000000e+00 : f32
    %73 = vector.broadcast %cst_44 : f32 to vector<8x128xf32>
    %74 = arith.maximumf %72, %73 : vector<8x128xf32>
    %cst_45 = arith.constant 0.000000e+00 : f32
    %75 = vector.broadcast %cst_45 : f32 to vector<8x128xf32>
    %76 = arith.select %7, %74, %75 : vector<8x128xi1>, vector<8x128xf32>
    %c127_i32_46 = arith.constant 127 : i32
    %77 = tpu.dynamic_rotate %76 by %c127_i32_46 dim 1 : vector<8x128xf32>, i32 -> vector<8x128xf32>
    %78 = arith.maximumf %76, %77 : vector<8x128xf32>
    %c4_i32_47 = arith.constant 4 : i32
    %79 = tpu.dynamic_rotate %8 by %c4_i32_47 dim 1 : vector<8x128xf32>, i32 -> vector<8x128xf32>
    %c3_i32_48 = arith.constant 3 : i32
    %80 = tpu.dynamic_rotate %8 by %c3_i32_48 dim 1 : vector<8x128xf32>, i32 -> vector<8x128xf32>
    %c2_i32_49 = arith.constant 2 : i32
    %81 = tpu.dynamic_rotate %8 by %c2_i32_49 dim 1 : vector<8x128xf32>, i32 -> vector<8x128xf32>
    %c1_i32_50 = arith.constant 1 : i32
    %82 = tpu.dynamic_rotate %8 by %c1_i32_50 dim 1 : vector<8x128xf32>, i32 -> vector<8x128xf32>
    %c127_i32_51 = arith.constant 127 : i32
    %83 = tpu.dynamic_rotate %8 by %c127_i32_51 dim 1 : vector<8x128xf32>, i32 -> vector<8x128xf32>
    %c126_i32_52 = arith.constant 126 : i32
    %84 = tpu.dynamic_rotate %8 by %c126_i32_52 dim 1 : vector<8x128xf32>, i32 -> vector<8x128xf32>
    %c125_i32_53 = arith.constant 125 : i32
    %85 = tpu.dynamic_rotate %8 by %c125_i32_53 dim 1 : vector<8x128xf32>, i32 -> vector<8x128xf32>
    %c124_i32_54 = arith.constant 124 : i32
    %86 = tpu.dynamic_rotate %8 by %c124_i32_54 dim 1 : vector<8x128xf32>, i32 -> vector<8x128xf32>
    %87 = tpu.concatenate %79, %80, %81, %82, %8, %83, %84, %85, %86 in 0 : vector<8x128xf32>, vector<8x128xf32>, vector<8x128xf32>, vector<8x128xf32>, vector<8x128xf32>, vector<8x128xf32>, vector<8x128xf32>, vector<8x128xf32>, vector<8x128xf32> -> vector<72x128xf32>
    %c6 = arith.constant 6 : index
    %c0_55 = arith.constant 0 : index
    %c0_56 = arith.constant 0 : index
    %88 = vector.load %arg2[%c6, %c0_55, %c0_56] : memref<9x8x72xf32, #tpu.memory_space<vmem>>, vector<1x8x72xf32>
    %89 = vector.shape_cast %88 : vector<1x8x72xf32> to vector<8x72xf32>
    %cst_57 = arith.constant dense<0.000000e+00> : vector<8x128xf32>
    %90 = tpu.matmul %89, %87, %cst_57 {dimension_numbers = #tpu.dot_dimension_numbers<[1], [0], [0], [1], [0, 0, 1, 1], [], []>} : vector<8x72xf32>, vector<72x128xf32>, vector<8x128xf32> -> vector<8x128xf32>
    %c6_58 = arith.constant 6 : index
    %c0_59 = arith.constant 0 : index
    %c0_60 = arith.constant 0 : index
    %91 = vector.load %arg3[%c6_58, %c0_59, %c0_60] : memref<9x8x1xf32, #tpu.memory_space<vmem>>, vector<1x8x1xf32>
    %92 = vector.shape_cast %91 : vector<1x8x1xf32> to vector<8x1xf32>
    %93 = vector.broadcast %92 : vector<8x1xf32> to vector<8x128xf32>
    %94 = arith.addf %90, %93 : vector<8x128xf32>
    %95 = arith.addf %78, %94 : vector<8x128xf32>
    %cst_61 = arith.constant 0.000000e+00 : f32
    %96 = vector.broadcast %cst_61 : f32 to vector<8x128xf32>
    %97 = arith.maximumf %95, %96 : vector<8x128xf32>
    %cst_62 = arith.constant 0.000000e+00 : f32
    %98 = vector.broadcast %cst_62 : f32 to vector<8x128xf32>
    %99 = arith.select %7, %97, %98 : vector<8x128xi1>, vector<8x128xf32>
    %c4_i32_63 = arith.constant 4 : i32
    %100 = tpu.dynamic_rotate %99 by %c4_i32_63 dim 1 : vector<8x128xf32>, i32 -> vector<8x128xf32>
    %c3_i32_64 = arith.constant 3 : i32
    %101 = tpu.dynamic_rotate %99 by %c3_i32_64 dim 1 : vector<8x128xf32>, i32 -> vector<8x128xf32>
    %c2_i32_65 = arith.constant 2 : i32
    %102 = tpu.dynamic_rotate %99 by %c2_i32_65 dim 1 : vector<8x128xf32>, i32 -> vector<8x128xf32>
    %c1_i32_66 = arith.constant 1 : i32
    %103 = tpu.dynamic_rotate %99 by %c1_i32_66 dim 1 : vector<8x128xf32>, i32 -> vector<8x128xf32>
    %c127_i32_67 = arith.constant 127 : i32
    %104 = tpu.dynamic_rotate %99 by %c127_i32_67 dim 1 : vector<8x128xf32>, i32 -> vector<8x128xf32>
    %c126_i32_68 = arith.constant 126 : i32
    %105 = tpu.dynamic_rotate %99 by %c126_i32_68 dim 1 : vector<8x128xf32>, i32 -> vector<8x128xf32>
    %c125_i32_69 = arith.constant 125 : i32
    %106 = tpu.dynamic_rotate %99 by %c125_i32_69 dim 1 : vector<8x128xf32>, i32 -> vector<8x128xf32>
    %c124_i32_70 = arith.constant 124 : i32
    %107 = tpu.dynamic_rotate %99 by %c124_i32_70 dim 1 : vector<8x128xf32>, i32 -> vector<8x128xf32>
    %108 = tpu.concatenate %100, %101, %102, %103, %99, %104, %105, %106, %107 in 0 : vector<8x128xf32>, vector<8x128xf32>, vector<8x128xf32>, vector<8x128xf32>, vector<8x128xf32>, vector<8x128xf32>, vector<8x128xf32>, vector<8x128xf32>, vector<8x128xf32> -> vector<72x128xf32>
    %c3 = arith.constant 3 : index
    %c0_71 = arith.constant 0 : index
    %c0_72 = arith.constant 0 : index
    %109 = vector.load %arg2[%c3, %c0_71, %c0_72] : memref<9x8x72xf32, #tpu.memory_space<vmem>>, vector<1x8x72xf32>
    %110 = vector.shape_cast %109 : vector<1x8x72xf32> to vector<8x72xf32>
    %cst_73 = arith.constant dense<0.000000e+00> : vector<8x128xf32>
    %111 = tpu.matmul %110, %108, %cst_73 {dimension_numbers = #tpu.dot_dimension_numbers<[1], [0], [0], [1], [0, 0, 1, 1], [], []>} : vector<8x72xf32>, vector<72x128xf32>, vector<8x128xf32> -> vector<8x128xf32>
    %c3_74 = arith.constant 3 : index
    %c0_75 = arith.constant 0 : index
    %c0_76 = arith.constant 0 : index
    %112 = vector.load %arg3[%c3_74, %c0_75, %c0_76] : memref<9x8x1xf32, #tpu.memory_space<vmem>>, vector<1x8x1xf32>
    %113 = vector.shape_cast %112 : vector<1x8x1xf32> to vector<8x1xf32>
    %114 = vector.broadcast %113 : vector<8x1xf32> to vector<8x128xf32>
    %115 = arith.addf %111, %114 : vector<8x128xf32>
    %cst_77 = arith.constant 0.000000e+00 : f32
    %116 = vector.broadcast %cst_77 : f32 to vector<8x128xf32>
    %117 = arith.maximumf %115, %116 : vector<8x128xf32>
    %cst_78 = arith.constant 0.000000e+00 : f32
    %118 = vector.broadcast %cst_78 : f32 to vector<8x128xf32>
    %119 = arith.select %7, %117, %118 : vector<8x128xi1>, vector<8x128xf32>
    %c127_i32_79 = arith.constant 127 : i32
    %120 = tpu.dynamic_rotate %119 by %c127_i32_79 dim 1 : vector<8x128xf32>, i32 -> vector<8x128xf32>
    %121 = arith.maximumf %119, %120 : vector<8x128xf32>
    %cst_80 = arith.constant 0.000000e+00 : f32
    %122 = vector.broadcast %cst_80 : f32 to vector<8x128xf32>
    %123 = arith.select %7, %121, %122 : vector<8x128xi1>, vector<8x128xf32>
    %c4_i32_81 = arith.constant 4 : i32
    %124 = tpu.dynamic_rotate %123 by %c4_i32_81 dim 1 : vector<8x128xf32>, i32 -> vector<8x128xf32>
    %c3_i32_82 = arith.constant 3 : i32
    %125 = tpu.dynamic_rotate %123 by %c3_i32_82 dim 1 : vector<8x128xf32>, i32 -> vector<8x128xf32>
    %c2_i32_83 = arith.constant 2 : i32
    %126 = tpu.dynamic_rotate %123 by %c2_i32_83 dim 1 : vector<8x128xf32>, i32 -> vector<8x128xf32>
    %c1_i32_84 = arith.constant 1 : i32
    %127 = tpu.dynamic_rotate %123 by %c1_i32_84 dim 1 : vector<8x128xf32>, i32 -> vector<8x128xf32>
    %c127_i32_85 = arith.constant 127 : i32
    %128 = tpu.dynamic_rotate %123 by %c127_i32_85 dim 1 : vector<8x128xf32>, i32 -> vector<8x128xf32>
    %c126_i32_86 = arith.constant 126 : i32
    %129 = tpu.dynamic_rotate %123 by %c126_i32_86 dim 1 : vector<8x128xf32>, i32 -> vector<8x128xf32>
    %c125_i32_87 = arith.constant 125 : i32
    %130 = tpu.dynamic_rotate %123 by %c125_i32_87 dim 1 : vector<8x128xf32>, i32 -> vector<8x128xf32>
    %c124_i32_88 = arith.constant 124 : i32
    %131 = tpu.dynamic_rotate %123 by %c124_i32_88 dim 1 : vector<8x128xf32>, i32 -> vector<8x128xf32>
    %132 = tpu.concatenate %124, %125, %126, %127, %123, %128, %129, %130, %131 in 0 : vector<8x128xf32>, vector<8x128xf32>, vector<8x128xf32>, vector<8x128xf32>, vector<8x128xf32>, vector<8x128xf32>, vector<8x128xf32>, vector<8x128xf32>, vector<8x128xf32> -> vector<72x128xf32>
    %c4 = arith.constant 4 : index
    %c0_89 = arith.constant 0 : index
    %c0_90 = arith.constant 0 : index
    %133 = vector.load %arg2[%c4, %c0_89, %c0_90] : memref<9x8x72xf32, #tpu.memory_space<vmem>>, vector<1x8x72xf32>
    %134 = vector.shape_cast %133 : vector<1x8x72xf32> to vector<8x72xf32>
    %cst_91 = arith.constant dense<0.000000e+00> : vector<8x128xf32>
    %135 = tpu.matmul %134, %132, %cst_91 {dimension_numbers = #tpu.dot_dimension_numbers<[1], [0], [0], [1], [0, 0, 1, 1], [], []>} : vector<8x72xf32>, vector<72x128xf32>, vector<8x128xf32> -> vector<8x128xf32>
    %c4_92 = arith.constant 4 : index
    %c0_93 = arith.constant 0 : index
    %c0_94 = arith.constant 0 : index
    %136 = vector.load %arg3[%c4_92, %c0_93, %c0_94] : memref<9x8x1xf32, #tpu.memory_space<vmem>>, vector<1x8x1xf32>
    %137 = vector.shape_cast %136 : vector<1x8x1xf32> to vector<8x1xf32>
    %138 = vector.broadcast %137 : vector<8x1xf32> to vector<8x128xf32>
    %139 = arith.addf %135, %138 : vector<8x128xf32>
    %cst_95 = arith.constant 0.000000e+00 : f32
    %140 = vector.broadcast %cst_95 : f32 to vector<8x128xf32>
    %141 = arith.maximumf %139, %140 : vector<8x128xf32>
    %cst_96 = arith.constant 0.000000e+00 : f32
    %142 = vector.broadcast %cst_96 : f32 to vector<8x128xf32>
    %143 = arith.select %7, %141, %142 : vector<8x128xi1>, vector<8x128xf32>
    %c127_i32_97 = arith.constant 127 : i32
    %144 = tpu.dynamic_rotate %143 by %c127_i32_97 dim 1 : vector<8x128xf32>, i32 -> vector<8x128xf32>
    %145 = arith.maximumf %143, %144 : vector<8x128xf32>
    %cst_98 = arith.constant 0.000000e+00 : f32
    %146 = vector.broadcast %cst_98 : f32 to vector<8x128xf32>
    %147 = arith.select %7, %145, %146 : vector<8x128xi1>, vector<8x128xf32>
    %c4_i32_99 = arith.constant 4 : i32
    %148 = tpu.dynamic_rotate %147 by %c4_i32_99 dim 1 : vector<8x128xf32>, i32 -> vector<8x128xf32>
    %c3_i32_100 = arith.constant 3 : i32
    %149 = tpu.dynamic_rotate %147 by %c3_i32_100 dim 1 : vector<8x128xf32>, i32 -> vector<8x128xf32>
    %c2_i32_101 = arith.constant 2 : i32
    %150 = tpu.dynamic_rotate %147 by %c2_i32_101 dim 1 : vector<8x128xf32>, i32 -> vector<8x128xf32>
    %c1_i32_102 = arith.constant 1 : i32
    %151 = tpu.dynamic_rotate %147 by %c1_i32_102 dim 1 : vector<8x128xf32>, i32 -> vector<8x128xf32>
    %c127_i32_103 = arith.constant 127 : i32
    %152 = tpu.dynamic_rotate %147 by %c127_i32_103 dim 1 : vector<8x128xf32>, i32 -> vector<8x128xf32>
    %c126_i32_104 = arith.constant 126 : i32
    %153 = tpu.dynamic_rotate %147 by %c126_i32_104 dim 1 : vector<8x128xf32>, i32 -> vector<8x128xf32>
    %c125_i32_105 = arith.constant 125 : i32
    %154 = tpu.dynamic_rotate %147 by %c125_i32_105 dim 1 : vector<8x128xf32>, i32 -> vector<8x128xf32>
    %c124_i32_106 = arith.constant 124 : i32
    %155 = tpu.dynamic_rotate %147 by %c124_i32_106 dim 1 : vector<8x128xf32>, i32 -> vector<8x128xf32>
    %156 = tpu.concatenate %148, %149, %150, %151, %147, %152, %153, %154, %155 in 0 : vector<8x128xf32>, vector<8x128xf32>, vector<8x128xf32>, vector<8x128xf32>, vector<8x128xf32>, vector<8x128xf32>, vector<8x128xf32>, vector<8x128xf32>, vector<8x128xf32> -> vector<72x128xf32>
    %c5 = arith.constant 5 : index
    %c0_107 = arith.constant 0 : index
    %c0_108 = arith.constant 0 : index
    %157 = vector.load %arg2[%c5, %c0_107, %c0_108] : memref<9x8x72xf32, #tpu.memory_space<vmem>>, vector<1x8x72xf32>
    %158 = vector.shape_cast %157 : vector<1x8x72xf32> to vector<8x72xf32>
    %cst_109 = arith.constant dense<0.000000e+00> : vector<8x128xf32>
    %159 = tpu.matmul %158, %156, %cst_109 {dimension_numbers = #tpu.dot_dimension_numbers<[1], [0], [0], [1], [0, 0, 1, 1], [], []>} : vector<8x72xf32>, vector<72x128xf32>, vector<8x128xf32> -> vector<8x128xf32>
    %c5_110 = arith.constant 5 : index
    %c0_111 = arith.constant 0 : index
    %c0_112 = arith.constant 0 : index
    %160 = vector.load %arg3[%c5_110, %c0_111, %c0_112] : memref<9x8x1xf32, #tpu.memory_space<vmem>>, vector<1x8x1xf32>
    %161 = vector.shape_cast %160 : vector<1x8x1xf32> to vector<8x1xf32>
    %162 = vector.broadcast %161 : vector<8x1xf32> to vector<8x128xf32>
    %163 = arith.addf %159, %162 : vector<8x128xf32>
    %cst_113 = arith.constant 0.000000e+00 : f32
    %164 = vector.broadcast %cst_113 : f32 to vector<8x128xf32>
    %165 = arith.maximumf %163, %164 : vector<8x128xf32>
    %cst_114 = arith.constant 0.000000e+00 : f32
    %166 = vector.broadcast %cst_114 : f32 to vector<8x128xf32>
    %167 = arith.select %7, %165, %166 : vector<8x128xi1>, vector<8x128xf32>
    %c127_i32_115 = arith.constant 127 : i32
    %168 = tpu.dynamic_rotate %167 by %c127_i32_115 dim 1 : vector<8x128xf32>, i32 -> vector<8x128xf32>
    %169 = arith.maximumf %167, %168 : vector<8x128xf32>
    %c4_i32_116 = arith.constant 4 : i32
    %170 = tpu.dynamic_rotate %99 by %c4_i32_116 dim 1 : vector<8x128xf32>, i32 -> vector<8x128xf32>
    %c3_i32_117 = arith.constant 3 : i32
    %171 = tpu.dynamic_rotate %99 by %c3_i32_117 dim 1 : vector<8x128xf32>, i32 -> vector<8x128xf32>
    %c2_i32_118 = arith.constant 2 : i32
    %172 = tpu.dynamic_rotate %99 by %c2_i32_118 dim 1 : vector<8x128xf32>, i32 -> vector<8x128xf32>
    %c1_i32_119 = arith.constant 1 : i32
    %173 = tpu.dynamic_rotate %99 by %c1_i32_119 dim 1 : vector<8x128xf32>, i32 -> vector<8x128xf32>
    %c127_i32_120 = arith.constant 127 : i32
    %174 = tpu.dynamic_rotate %99 by %c127_i32_120 dim 1 : vector<8x128xf32>, i32 -> vector<8x128xf32>
    %c126_i32_121 = arith.constant 126 : i32
    %175 = tpu.dynamic_rotate %99 by %c126_i32_121 dim 1 : vector<8x128xf32>, i32 -> vector<8x128xf32>
    %c125_i32_122 = arith.constant 125 : i32
    %176 = tpu.dynamic_rotate %99 by %c125_i32_122 dim 1 : vector<8x128xf32>, i32 -> vector<8x128xf32>
    %c124_i32_123 = arith.constant 124 : i32
    %177 = tpu.dynamic_rotate %99 by %c124_i32_123 dim 1 : vector<8x128xf32>, i32 -> vector<8x128xf32>
    %178 = tpu.concatenate %170, %171, %172, %173, %99, %174, %175, %176, %177 in 0 : vector<8x128xf32>, vector<8x128xf32>, vector<8x128xf32>, vector<8x128xf32>, vector<8x128xf32>, vector<8x128xf32>, vector<8x128xf32>, vector<8x128xf32>, vector<8x128xf32> -> vector<72x128xf32>
    %c7 = arith.constant 7 : index
    %c0_124 = arith.constant 0 : index
    %c0_125 = arith.constant 0 : index
    %179 = vector.load %arg2[%c7, %c0_124, %c0_125] : memref<9x8x72xf32, #tpu.memory_space<vmem>>, vector<1x8x72xf32>
    %180 = vector.shape_cast %179 : vector<1x8x72xf32> to vector<8x72xf32>
    %cst_126 = arith.constant dense<0.000000e+00> : vector<8x128xf32>
    %181 = tpu.matmul %180, %178, %cst_126 {dimension_numbers = #tpu.dot_dimension_numbers<[1], [0], [0], [1], [0, 0, 1, 1], [], []>} : vector<8x72xf32>, vector<72x128xf32>, vector<8x128xf32> -> vector<8x128xf32>
    %c7_127 = arith.constant 7 : index
    %c0_128 = arith.constant 0 : index
    %c0_129 = arith.constant 0 : index
    %182 = vector.load %arg3[%c7_127, %c0_128, %c0_129] : memref<9x8x1xf32, #tpu.memory_space<vmem>>, vector<1x8x1xf32>
    %183 = vector.shape_cast %182 : vector<1x8x1xf32> to vector<8x1xf32>
    %184 = vector.broadcast %183 : vector<8x1xf32> to vector<8x128xf32>
    %185 = arith.addf %181, %184 : vector<8x128xf32>
    %186 = arith.addf %169, %185 : vector<8x128xf32>
    %cst_130 = arith.constant 0.000000e+00 : f32
    %187 = vector.broadcast %cst_130 : f32 to vector<8x128xf32>
    %188 = arith.maximumf %186, %187 : vector<8x128xf32>
    %cst_131 = arith.constant 0.000000e+00 : f32
    %189 = vector.broadcast %cst_131 : f32 to vector<8x128xf32>
    %190 = arith.select %7, %188, %189 : vector<8x128xi1>, vector<8x128xf32>
    %c127_i32_132 = arith.constant 127 : i32
    %191 = tpu.dynamic_rotate %190 by %c127_i32_132 dim 1 : vector<8x128xf32>, i32 -> vector<8x128xf32>
    %192 = arith.addf %190, %191 : vector<8x128xf32>
    %cst_133 = arith.constant 5.000000e-01 : f32
    %193 = vector.broadcast %cst_133 : f32 to vector<8x128xf32>
    %194 = arith.mulf %193, %192 : vector<8x128xf32>
    %c8 = arith.constant 8 : index
    %c0_134 = arith.constant 0 : index
    %c0_135 = arith.constant 0 : index
    %195 = vector.load %arg2[%c8, %c0_134, %c0_135] : memref<9x8x72xf32, #tpu.memory_space<vmem>>, vector<1x8x72xf32>
    %196 = vector.shape_cast %195 : vector<1x8x72xf32> to vector<8x72xf32>
    %197 = vector.extract_strided_slice %196 {offsets = [0, 0], sizes = [8, 8], strides = [1, 1]} : vector<8x72xf32> to vector<8x8xf32>
    %cst_136 = arith.constant dense<0.000000e+00> : vector<8x128xf32>
    %198 = tpu.matmul %197, %194, %cst_136 {dimension_numbers = #tpu.dot_dimension_numbers<[1], [0], [0], [1], [0, 0, 1, 1], [], []>} : vector<8x8xf32>, vector<8x128xf32>, vector<8x128xf32> -> vector<8x128xf32>
    %c8_137 = arith.constant 8 : index
    %c0_138 = arith.constant 0 : index
    %c0_139 = arith.constant 0 : index
    %199 = vector.load %arg3[%c8_137, %c0_138, %c0_139] : memref<9x8x1xf32, #tpu.memory_space<vmem>>, vector<1x8x1xf32>
    %200 = vector.shape_cast %199 : vector<1x8x1xf32> to vector<8x1xf32>
    %201 = vector.broadcast %200 : vector<8x1xf32> to vector<8x128xf32>
    %202 = arith.addf %198, %201 : vector<8x128xf32>
    %cst_140 = arith.constant 0.000000e+00 : f32
    %203 = vector.broadcast %cst_140 : f32 to vector<8x128xf32>
    %204 = arith.maximumf %202, %203 : vector<8x128xf32>
    %cst_141 = arith.constant 0.000000e+00 : f32
    %205 = vector.broadcast %cst_141 : f32 to vector<8x128xf32>
    %206 = arith.select %7, %204, %205 : vector<8x128xi1>, vector<8x128xf32>
    %c127_i32_142 = arith.constant 127 : i32
    %207 = tpu.dynamic_rotate %206 by %c127_i32_142 dim 1 : vector<8x128xf32>, i32 -> vector<8x128xf32>
    %208 = arith.maximumf %206, %207 : vector<8x128xf32>
    %c0_143 = arith.constant 0 : index
    %c0_144 = arith.constant 0 : index
    %209 = vector.load %arg4[%c0_143, %c0_144] : memref<128x2xf32, #tpu.memory_space<vmem>>, vector<128x2xf32>
    %cst_145 = arith.constant dense<0.000000e+00> : vector<8x2xf32>
    %210 = tpu.matmul %208, %209, %cst_145 {dimension_numbers = #tpu.dot_dimension_numbers<[1], [0], [0], [1], [0, 0, 1, 1], [], []>} : vector<8x128xf32>, vector<128x2xf32>, vector<8x2xf32> -> vector<8x2xf32>
    %c0_146 = arith.constant 0 : index
    %c0_147 = arith.constant 0 : index
    %211 = vector.load %arg5[%c0_146, %c0_147] : memref<8x2xf32, #tpu.memory_space<vmem>>, vector<8x2xf32>
    tpu.vector_store %arg5[%c0_146, %c0_147], %210 {strides = array<i32>} : memref<8x2xf32, #tpu.memory_space<vmem>>, vector<8x2xf32>,
    return
  }
  func.func @transform_0(%arg0: i32) -> (i32, i32) {
    %c0_i32 = arith.constant 0 : i32
    %c0_i32_0 = arith.constant 0 : i32
    %c0_i32_1 = arith.constant 0 : i32
    return %c0_i32, %c0_i32_0 : i32, i32
  }
  func.func @transform_1(%arg0: i32) -> (i32, i32, i32) {
    %c0_i32 = arith.constant 0 : i32
    %c0_i32_0 = arith.constant 0 : i32
    %c0_i32_1 = arith.constant 0 : i32
    %c0_i32_2 = arith.constant 0 : i32
    return %c0_i32, %c0_i32_0, %c0_i32_1 : i32, i32, i32
  }
  func.func @transform_2(%arg0: i32) -> (i32, i32, i32) {
    %c0_i32 = arith.constant 0 : i32
    %c0_i32_0 = arith.constant 0 : i32
    %c0_i32_1 = arith.constant 0 : i32
    %c0_i32_2 = arith.constant 0 : i32
    return %c0_i32, %c0_i32_0, %c0_i32_1 : i32, i32, i32
  }
  func.func @transform_3(%arg0: i32) -> (i32, i32) {
    %c0_i32 = arith.constant 0 : i32
    %c0_i32_0 = arith.constant 0 : i32
    %c0_i32_1 = arith.constant 0 : i32
    return %c0_i32, %c0_i32_0 : i32, i32
  }
  func.func @transform_4(%arg0: i32) -> (i32, i32) {
    %c0_i32 = arith.constant 0 : i32
    %c0_i32_0 = arith.constant 0 : i32
    %c0_i32_1 = arith.constant 0 : i32
    return %c0_i32, %c0_i32_0 : i32, i32
  }
}

</mosaic_0001>

<llo_original>
// kernel: _forward_impl.1
$region0: #{_forward_impl.1}
  #allocation0 [shape = 'u32[]', space=smem, size = 0x4, offset = 0x4, fixed_abs, tag = 'smem constant byte address 0x4 - core index']
  #allocation1 [shape = 'u32[144,128]{1,0:T(1,128)}', space=vmem, size = 0x12000, scoped, tag = 'internal scratch']
  %s0 = inlined_call_operand.vmem [shape: f32[8,128], index: 0, kind: input, shape index: {}]
  %s1 = inlined_call_operand.vmem [shape: f32[9,8,72], index: 1, kind: input, shape index: {}]
  %s2 = inlined_call_operand.vmem [shape: f32[9,8,1], index: 2, kind: input, shape index: {}]
  %s3 = inlined_call_operand.vmem [shape: f32[128,2], index: 3, kind: input, shape index: {}]
  %s4 = inlined_call_operand.vmem [shape: f32[8,2], index: 4, kind: output, shape index: {}]
  %s5 = sld [smem:[#allocation0]]
  $region26: #{_forward_impl.1} parent=0
    _
  %s7 = ssub.s32 1, %s5
  %s8 = scalar_select 0, %s7, %s5
  // Predicated region
  $region2: #{_forward_impl.1} parent=0 // pred_check
    _
  $region3: #{_forward_impl.1} parent=0 // pred_check_branch
    %10 = sbr.rel (0) target = $region5
  $region4: #{_forward_impl.1} parent=0 // pred_region
    _
  $region5: #{_forward_impl.1} parent=0 // pred_fallthru
    _
  // Predicated region
  $region6: #{_forward_impl.1} parent=0 // pred_check
    _
  $region7: #{_forward_impl.1} parent=0 // pred_check_branch
    %12 = sbr.rel (0) target = $region9
  $region8: #{_forward_impl.1} parent=0 // pred_region
    _
  $region9: #{_forward_impl.1} parent=0 // pred_fallthru
    _
  // Predicated region
  $region10: #{_forward_impl.1} parent=0 // pred_check
    _
  $region11: #{_forward_impl.1} parent=0 // pred_check_branch
    %14 = sbr.rel (0) target = $region13
  $region12: #{_forward_impl.1} parent=0 // pred_region
    _
  $region13: #{_forward_impl.1} parent=0 // pred_fallthru
    _
  // Predicated region
  $region14: #{_forward_impl.1} parent=0 // pred_check
    _
  $region15: #{_forward_impl.1} parent=0 // pred_check_branch
    %16 = sbr.rel (0) target = $region17
  $region16: #{_forward_impl.1} parent=0 // pred_region
    _
  $region17: #{_forward_impl.1} parent=0 // pred_fallthru
    _
  %v17 = vlaneseq
  %v18 = vand.u32 %v17, 127
  %v19 = vand.u32 %v18, 63
  %vm20 = vcmp.ge.s32.totalorder %v19, 4
  %vm21 = vcmp.lt.s32.totalorder %v19, 36
  %vm22 = vmand %vm20, %vm21
  %v23 = vld [vmem:[%s0] sm:$0xff]
  %24 = vrot.lane.b32.xlu0 %v23, 4
  %v25 = vpop.permute.xlu0 %24
  %26 = vrot.lane.b32.xlu0 %v23, 3
  %v27 = vpop.permute.xlu0 %26
  %28 = vrot.lane.b32.xlu0 %v23, 2
  %v29 = vpop.permute.xlu0 %28
  %30 = vrot.lane.b32.xlu0 %v23, 1
  %v31 = vpop.permute.xlu0 %30
  %32 = vrot.lane.b32.xlu0 %v23, 127
  %v33 = vpop.permute.xlu0 %32
  %34 = vrot.lane.b32.xlu0 %v23, 126
  %v35 = vpop.permute.xlu0 %34
  %36 = vrot.lane.b32.xlu0 %v23, 125
  %v37 = vpop.permute.xlu0 %36
  %38 = vrot.lane.b32.xlu0 %v23, 124
  %v39 = vpop.permute.xlu0 %38
  %v40 = vld [vmem:[%s1] sm:$0xff]
  %v41 = vld [vmem:[%s2] sm:$0xff]
  %43 = vset.pattern.permute.xlu0 0
  %44 = vperm.xlu0 %43, %v41
  %v45 = vpop.permute.xlu0 %44
  %vm47 = vcmask 588800
  %v49 = vsel %vm47, %v40, 0
  %51 = vmatprep.subr.mxu0 0.0
  %52 = vmatpush1.msra.mxu0 %v25
  %53 = vmatprep.subr.mxu0 0.0
  %54 = vmatpush1.msra.mxu0 %v27
  %55 = vmatprep.subr.mxu0 0.0
  %56 = vmatpush1.msra.mxu0 %v29
  %57 = vmatprep.subr.mxu0 0.0
  %58 = vmatpush1.msra.mxu0 %v31
  %59 = vmatprep.subr.mxu0 0.0
  %60 = vmatpush1.msra.mxu0 %v23
  %61 = vmatprep.subr.mxu0 0.0
  %62 = vmatpush1.msra.mxu0 %v33
  %63 = vmatprep.subr.mxu0 0.0
  %64 = vmatpush1.msra.mxu0 %v35
  %65 = vmatprep.subr.mxu0 0.0
  %66 = vmatpush1.msra.mxu0 %v37
  %67 = vmatprep.subr.mxu0 0.0
  %68 = vmatpush1.msra.mxu0 %v39
  %69 = vmatprep.subr.mxu0 0.0
  %70 = vmatpush1.msra.mxu0 0.0
  %71 = vmatprep.subr.mxu0 0.0
  %72 = vmatpush1.msra.mxu0 0.0
  %73 = vmatprep.subr.mxu0 0.0
  %74 = vmatpush1.msra.mxu0 0.0
  %75 = vmatprep.subr.mxu0 0.0
  %76 = vmatpush1.msra.mxu0 0.0
  %77 = vmatprep.subr.mxu0 0.0
  %78 = vmatpush1.msra.mxu0 0.0
  %79 = vmatprep.subr.mxu0 0.0
  %80 = vmatpush1.msra.mxu0 0.0
  %81 = vmatprep.subr.mxu0 0.0
  %82 = vmatpush1.msra.mxu0 0.0
  %83 = vmatprep.subr.mxu0 0.0
  %84 = vmatpush1.msra.mxu0 0.0
  %85 = vmatprep.subr.mxu0 0.0
  %86 = vmatpush1.msra.mxu0 0.0
  %87 = vmatprep.subr.mxu0 0.0
  %88 = vmatpush1.msra.mxu0 0.0
  %89 = vmatprep.subr.mxu0 0.0
  %90 = vmatpush1.msra.mxu0 0.0
  %91 = vmatprep.subr.mxu0 0.0
  %92 = vmatpush1.msra.mxu0 0.0
  %93 = vmatprep.subr.mxu0 0.0
  %94 = vmatpush1.msra.mxu0 0.0
  %95 = vmatprep.subr.mxu0 0.0
  %96 = vmatpush1.msra.mxu0 0.0
  %97 = vmatprep.subr.mxu0 0.0
  %98 = vmatpush1.msra.mxu0 0.0
  %99 = vmatprep.subr.mxu0 0.0
  %100 = vmatpush1.msra.mxu0 0.0
  %101 = vmatprep.subr.mxu0 0.0
  %102 = vmatpush1.msra.mxu0 0.0
  %103 = vmatprep.subr.mxu0 0.0
  %104 = vmatpush1.msra.mxu0 0.0
  %105 = vmatprep.subr.mxu0 0.0
  %106 = vmatpush1.msra.mxu0 0.0
  %107 = vmatprep.subr.mxu0 0.0
  %108 = vmatpush1.msra.mxu0 0.0
  %109 = vmatprep.subr.mxu0 0.0
  %110 = vmatpush1.msra.mxu0 0.0
  %111 = vmatprep.subr.mxu0 0.0
  %112 = vmatpush1.msra.mxu0 0.0
  %113 = vmatprep.subr.mxu0 0.0
  %114 = vmatpush1.msra.mxu0 0.0
  %115 = vmatprep.mubr.f32.mxu0 0.0
  %116 = vmatmul.mubr.f32.gmra.mrb[0].mxu0 %v49
  %v117 = vpop.f32.mrb[0].mxu0
  %v118 = vadd.f32 %v45, %v117
  %v119 = vpop.f32.mrb[0].mxu0
  %120 = vdwg.mxu0
  %v121 = vmax.f32 %v118, 0.0
  %v122 = vsel %vm22, %v121, 0.0
  %123 = vrot.lane.b32.xlu0 %v122, 127
  %v124 = vpop.permute.xlu0 %123
  %v125 = vmax.f32 %v122, %v124
  %v126 = vsel %vm22, %v125, 0.0
  %127 = vrot.lane.b32.xlu0 %v126, 4
  %v128 = vpop.permute.xlu0 %127
  %129 = vrot.lane.b32.xlu0 %v126, 3
  %v130 = vpop.permute.xlu0 %129
  %131 = vrot.lane.b32.xlu0 %v126, 2
  %v132 = vpop.permute.xlu0 %131
  %133 = vrot.lane.b32.xlu0 %v126, 1
  %v134 = vpop.permute.xlu0 %133
  %135 = vrot.lane.b32.xlu0 %v126, 127
  %v136 = vpop.permute.xlu0 %135
  %137 = vrot.lane.b32.xlu0 %v126, 126
  %v138 = vpop.permute.xlu0 %137
  %139 = vrot.lane.b32.xlu0 %v126, 125
  %v140 = vpop.permute.xlu0 %139
  %141 = vrot.lane.b32.xlu0 %v126, 124
  %v142 = vpop.permute.xlu0 %141
  %s143 = scalar_lea.vmem %s1, 8
  %v144 = vld [vmem:[%s143] sm:$0xff]
  %s145 = scalar_lea.vmem %s2, 8
  %v146 = vld [vmem:[%s145] sm:$0xff]
  %148 = vset.pattern.permute.xlu0 0
  %149 = vperm.xlu0 %148, %v146
  %v150 = vpop.permute.xlu0 %149
  %v153 = vsel %vm47, %v144, 0
  %155 = vmatprep.subr.mxu0 0.0
  %156 = vmatpush1.msra.mxu0 %v128
  %157 = vmatprep.subr.mxu0 0.0
  %158 = vmatpush1.msra.mxu0 %v130
  %159 = vmatprep.subr.mxu0 0.0
  %160 = vmatpush1.msra.mxu0 %v132
  %161 = vmatprep.subr.mxu0 0.0
  %162 = vmatpush1.msra.mxu0 %v134
  %163 = vmatprep.subr.mxu0 0.0
  %164 = vmatpush1.msra.mxu0 %v126
  %165 = vmatprep.subr.mxu0 0.0
  %166 = vmatpush1.msra.mxu0 %v136
  %167 = vmatprep.subr.mxu0 0.0
  %168 = vmatpush1.msra.mxu0 %v138
  %169 = vmatprep.subr.mxu0 0.0
  %170 = vmatpush1.msra.mxu0 %v140
  %171 = vmatprep.subr.mxu0 0.0
  %172 = vmatpush1.msra.mxu0 %v142
  %173 = vmatprep.subr.mxu0 0.0
  %174 = vmatpush1.msra.mxu0 0.0
  %175 = vmatprep.subr.mxu0 0.0
  %176 = vmatpush1.msra.mxu0 0.0
  %177 = vmatprep.subr.mxu0 0.0
  %178 = vmatpush1.msra.mxu0 0.0
  %179 = vmatprep.subr.mxu0 0.0
  %180 = vmatpush1.msra.mxu0 0.0
  %181 = vmatprep.subr.mxu0 0.0
  %182 = vmatpush1.msra.mxu0 0.0
  %183 = vmatprep.subr.mxu0 0.0
  %184 = vmatpush1.msra.mxu0 0.0
  %185 = vmatprep.subr.mxu0 0.0
  %186 = vmatpush1.msra.mxu0 0.0
  %187 = vmatprep.subr.mxu0 0.0
  %188 = vmatpush1.msra.mxu0 0.0
  %189 = vmatprep.subr.mxu0 0.0
  %190 = vmatpush1.msra.mxu0 0.0
  %191 = vmatprep.subr.mxu0 0.0
  %192 = vmatpush1.msra.mxu0 0.0
  %193 = vmatprep.subr.mxu0 0.0
  %194 = vmatpush1.msra.mxu0 0.0
  %195 = vmatprep.subr.mxu0 0.0
  %196 = vmatpush1.msra.mxu0 0.0
  %197 = vmatprep.subr.mxu0 0.0
  %198 = vmatpush1.msra.mxu0 0.0
  %199 = vmatprep.subr.mxu0 0.0
  %200 = vmatpush1.msra.mxu0 0.0
  %201 = vmatprep.subr.mxu0 0.0
  %202 = vmatpush1.msra.mxu0 0.0
  %203 = vmatprep.subr.mxu0 0.0
  %204 = vmatpush1.msra.mxu0 0.0
  %205 = vmatprep.subr.mxu0 0.0
  %206 = vmatpush1.msra.mxu0 0.0
  %207 = vmatprep.subr.mxu0 0.0
  %208 = vmatpush1.msra.mxu0 0.0
  %209 = vmatprep.subr.mxu0 0.0
  %210 = vmatpush1.msra.mxu0 0.0
  %211 = vmatprep.subr.mxu0 0.0
  %212 = vmatpush1.msra.mxu0 0.0
  %213 = vmatprep.subr.mxu0 0.0
  %214 = vmatpush1.msra.mxu0 0.0
  %215 = vmatprep.subr.mxu0 0.0
  %216 = vmatpush1.msra.mxu0 0.0
  %217 = vmatprep.subr.mxu0 0.0
  %218 = vmatpush1.msra.mxu0 0.0
  %219 = vmatprep.mubr.f32.mxu0 0.0
  %220 = vmatmul.mubr.f32.gmra.mrb[0].mxu0 %v153
  %v221 = vpop.f32.mrb[0].mxu0
  %v222 = vadd.f32 %v150, %v221
  %v223 = vpop.f32.mrb[0].mxu0
  %224 = vdwg.mxu0
  %v225 = vmax.f32 %v222, 0.0
  %v226 = vsel %vm22, %v225, 0.0
  %227 = vrot.lane.b32.xlu0 %v226, 127
  %v228 = vpop.permute.xlu0 %227
  %v229 = vmax.f32 %v226, %v228
  %v230 = vsel %vm22, %v229, 0.0
  %231 = vrot.lane.b32.xlu0 %v230, 4
  %v232 = vpop.permute.xlu0 %231
  %233 = vrot.lane.b32.xlu0 %v230, 3
  %v234 = vpop.permute.xlu0 %233
  %235 = vrot.lane.b32.xlu0 %v230, 2
  %v236 = vpop.permute.xlu0 %235
  %237 = vrot.lane.b32.xlu0 %v230, 1
  %v238 = vpop.permute.xlu0 %237
  %239 = vrot.lane.b32.xlu0 %v230, 127
  %v240 = vpop.permute.xlu0 %239
  %241 = vrot.lane.b32.xlu0 %v230, 126
  %v242 = vpop.permute.xlu0 %241
  %243 = vrot.lane.b32.xlu0 %v230, 125
  %v244 = vpop.permute.xlu0 %243
  %245 = vrot.lane.b32.xlu0 %v230, 124
  %v246 = vpop.permute.xlu0 %245
  %s247 = scalar_lea.vmem %s1, 16
  %v248 = vld [vmem:[%s247] sm:$0xff]
  %s249 = scalar_lea.vmem %s2, 16
  %v250 = vld [vmem:[%s249] sm:$0xff]
  %252 = vset.pattern.permute.xlu0 0
  %253 = vperm.xlu0 %252, %v250
  %v254 = vpop.permute.xlu0 %253
  %v257 = vsel %vm47, %v248, 0
  %259 = vmatprep.subr.mxu0 0.0
  %260 = vmatpush1.msra.mxu0 %v232
  %261 = vmatprep.subr.mxu0 0.0
  %262 = vmatpush1.msra.mxu0 %v234
  %263 = vmatprep.subr.mxu0 0.0
  %264 = vmatpush1.msra.mxu0 %v236
  %265 = vmatprep.subr.mxu0 0.0
  %266 = vmatpush1.msra.mxu0 %v238
  %267 = vmatprep.subr.mxu0 0.0
  %268 = vmatpush1.msra.mxu0 %v230
  %269 = vmatprep.subr.mxu0 0.0
  %270 = vmatpush1.msra.mxu0 %v240
  %271 = vmatprep.subr.mxu0 0.0
  %272 = vmatpush1.msra.mxu0 %v242
  %273 = vmatprep.subr.mxu0 0.0
  %274 = vmatpush1.msra.mxu0 %v244
  %275 = vmatprep.subr.mxu0 0.0
  %276 = vmatpush1.msra.mxu0 %v246
  %277 = vmatprep.subr.mxu0 0.0
  %278 = vmatpush1.msra.mxu0 0.0
  %279 = vmatprep.subr.mxu0 0.0
  %280 = vmatpush1.msra.mxu0 0.0
  %281 = vmatprep.subr.mxu0 0.0
  %282 = vmatpush1.msra.mxu0 0.0
  %283 = vmatprep.subr.mxu0 0.0
  %284 = vmatpush1.msra.mxu0 0.0
  %285 = vmatprep.subr.mxu0 0.0
  %286 = vmatpush1.msra.mxu0 0.0
  %287 = vmatprep.subr.mxu0 0.0
  %288 = vmatpush1.msra.mxu0 0.0
  %289 = vmatprep.subr.mxu0 0.0
  %290 = vmatpush1.msra.mxu0 0.0
  %291 = vmatprep.subr.mxu0 0.0
  %292 = vmatpush1.msra.mxu0 0.0
  %293 = vmatprep.subr.mxu0 0.0
  %294 = vmatpush1.msra.mxu0 0.0
  %295 = vmatprep.subr.mxu0 0.0
  %296 = vmatpush1.msra.mxu0 0.0
  %297 = vmatprep.subr.mxu0 0.0
  %298 = vmatpush1.msra.mxu0 0.0
  %299 = vmatprep.subr.mxu0 0.0
  %300 = vmatpush1.msra.mxu0 0.0
  %301 = vmatprep.subr.mxu0 0.0
  %302 = vmatpush1.msra.mxu0 0.0
  %303 = vmatprep.subr.mxu0 0.0
  %304 = vmatpush1.msra.mxu0 0.0
  %305 = vmatprep.subr.mxu0 0.0
  %306 = vmatpush1.msra.mxu0 0.0
  %307 = vmatprep.subr.mxu0 0.0
  %308 = vmatpush1.msra.mxu0 0.0
  %309 = vmatprep.subr.mxu0 0.0
  %310 = vmatpush1.msra.mxu0 0.0
  %311 = vmatprep.subr.mxu0 0.0
  %312 = vmatpush1.msra.mxu0 0.0
  %313 = vmatprep.subr.mxu0 0.0
  %314 = vmatpush1.msra.mxu0 0.0
  %315 = vmatprep.subr.mxu0 0.0
  %316 = vmatpush1.msra.mxu0 0.0
  %317 = vmatprep.subr.mxu0 0.0
  %318 = vmatpush1.msra.mxu0 0.0
  %319 = vmatprep.subr.mxu0 0.0
  %320 = vmatpush1.msra.mxu0 0.0
  %321 = vmatprep.subr.mxu0 0.0
  %322 = vmatpush1.msra.mxu0 0.0
  %323 = vmatprep.mubr.f32.mxu0 0.0
  %324 = vmatmul.mubr.f32.gmra.mrb[0].mxu0 %v257
  %v325 = vpop.f32.mrb[0].mxu0
  %v326 = vadd.f32 %v254, %v325
  %v327 = vpop.f32.mrb[0].mxu0
  %328 = vdwg.mxu0
  %v329 = vmax.f32 %v326, 0.0
  %v330 = vsel %vm22, %v329, 0.0
  %331 = vrot.lane.b32.xlu0 %v330, 127
  %v332 = vpop.permute.xlu0 %331
  %v333 = vmax.f32 %v330, %v332
  %s334 = scalar_lea.vmem %s1, 48
  %v335 = vld [vmem:[%s334] sm:$0xff]
  %s336 = scalar_lea.vmem %s2, 48
  %v337 = vld [vmem:[%s336] sm:$0xff]
  %339 = vset.pattern.permute.xlu0 0
  %340 = vperm.xlu0 %339, %v337
  %v341 = vpop.permute.xlu0 %340
  %v344 = vsel %vm47, %v335, 0
  %346 = vmatprep.subr.mxu0 0.0
  %347 = vmatpush1.msra.mxu0 %v25
  %348 = vmatprep.subr.mxu0 0.0
  %349 = vmatpush1.msra.mxu0 %v27
  %350 = vmatprep.subr.mxu0 0.0
  %351 = vmatpush1.msra.mxu0 %v29
  %352 = vmatprep.subr.mxu0 0.0
  %353 = vmatpush1.msra.mxu0 %v31
  %354 = vmatprep.subr.mxu0 0.0
  %355 = vmatpush1.msra.mxu0 %v23
  %356 = vmatprep.subr.mxu0 0.0
  %357 = vmatpush1.msra.mxu0 %v33
  %358 = vmatprep.subr.mxu0 0.0
  %359 = vmatpush1.msra.mxu0 %v35
  %360 = vmatprep.subr.mxu0 0.0
  %361 = vmatpush1.msra.mxu0 %v37
  %362 = vmatprep.subr.mxu0 0.0
  %363 = vmatpush1.msra.mxu0 %v39
  %364 = vmatprep.subr.mxu0 0.0
  %365 = vmatpush1.msra.mxu0 0.0
  %366 = vmatprep.subr.mxu0 0.0
  %367 = vmatpush1.msra.mxu0 0.0
  %368 = vmatprep.subr.mxu0 0.0
  %369 = vmatpush1.msra.mxu0 0.0
  %370 = vmatprep.subr.mxu0 0.0
  %371 = vmatpush1.msra.mxu0 0.0
  %372 = vmatprep.subr.mxu0 0.0
  %373 = vmatpush1.msra.mxu0 0.0
  %374 = vmatprep.subr.mxu0 0.0
  %375 = vmatpush1.msra.mxu0 0.0
  %376 = vmatprep.subr.mxu0 0.0
  %377 = vmatpush1.msra.mxu0 0.0
  %378 = vmatprep.subr.mxu0 0.0
  %379 = vmatpush1.msra.mxu0 0.0
  %380 = vmatprep.subr.mxu0 0.0
  %381 = vmatpush1.msra.mxu0 0.0
  %382 = vmatprep.subr.mxu0 0.0
  %383 = vmatpush1.msra.mxu0 0.0
  %384 = vmatprep.subr.mxu0 0.0
  %385 = vmatpush1.msra.mxu0 0.0
  %386 = vmatprep.subr.mxu0 0.0
  %387 = vmatpush1.msra.mxu0 0.0
  %388 = vmatprep.subr.mxu0 0.0
  %389 = vmatpush1.msra.mxu0 0.0
  %390 = vmatprep.subr.mxu0 0.0
  %391 = vmatpush1.msra.mxu0 0.0
  %392 = vmatprep.subr.mxu0 0.0
  %393 = vmatpush1.msra.mxu0 0.0
  %394 = vmatprep.subr.mxu0 0.0
  %395 = vmatpush1.msra.mxu0 0.0
  %396 = vmatprep.subr.mxu0 0.0
  %397 = vmatpush1.msra.mxu0 0.0
  %398 = vmatprep.subr.mxu0 0.0
  %399 = vmatpush1.msra.mxu0 0.0
  %400 = vmatprep.subr.mxu0 0.0
  %401 = vmatpush1.msra.mxu0 0.0
  %402 = vmatprep.subr.mxu0 0.0
  %403 = vmatpush1.msra.mxu0 0.0
  %404 = vmatprep.subr.mxu0 0.0
  %405 = vmatpush1.msra.mxu0 0.0
  %406 = vmatprep.subr.mxu0 0.0
  %407 = vmatpush1.msra.mxu0 0.0
  %408 = vmatprep.subr.mxu0 0.0
  %409 = vmatpush1.msra.mxu0 0.0
  %410 = vmatprep.mubr.f32.mxu0 0.0
  %411 = vmatmul.mubr.f32.gmra.mrb[0].mxu0 %v344
  %v412 = vpop.f32.mrb[0].mxu0
  %v413 = vadd.f32 %v341, %v412
  %v414 = vpop.f32.mrb[0].mxu0
  %415 = vdwg.mxu0
  %v416 = vadd.f32 %v333, %v413
  %v417 = vmax.f32 %v416, 0.0
  %v418 = vsel %vm22, %v417, 0.0
  %419 = vrot.lane.b32.xlu0 %v418, 4
  %v420 = vpop.permute.xlu0 %419
  %421 = vrot.lane.b32.xlu0 %v418, 3
  %v422 = vpop.permute.xlu0 %421
  %423 = vrot.lane.b32.xlu0 %v418, 2
  %v424 = vpop.permute.xlu0 %423
  %425 = vrot.lane.b32.xlu0 %v418, 1
  %v426 = vpop.permute.xlu0 %425
  %427 = vrot.lane.b32.xlu0 %v418, 127
  %v428 = vpop.permute.xlu0 %427
  %429 = vrot.lane.b32.xlu0 %v418, 126
  %v430 = vpop.permute.xlu0 %429
  %431 = vrot.lane.b32.xlu0 %v418, 125
  %v432 = vpop.permute.xlu0 %431
  %433 = vrot.lane.b32.xlu0 %v418, 124
  %v434 = vpop.permute.xlu0 %433
  %s435 = scalar_lea.vmem %s1, 24
  %v436 = vld [vmem:[%s435] sm:$0xff]
  %s437 = scalar_lea.vmem %s2, 24
  %v438 = vld [vmem:[%s437] sm:$0xff]
  %440 = vset.pattern.permute.xlu0 0
  %441 = vperm.xlu0 %440, %v438
  %v442 = vpop.permute.xlu0 %441
  %v445 = vsel %vm47, %v436, 0
  %447 = vmatprep.subr.mxu0 0.0
  %448 = vmatpush1.msra.mxu0 %v420
  %449 = vmatprep.subr.mxu0 0.0
  %450 = vmatpush1.msra.mxu0 %v422
  %451 = vmatprep.subr.mxu0 0.0
  %452 = vmatpush1.msra.mxu0 %v424
  %453 = vmatprep.subr.mxu0 0.0
  %454 = vmatpush1.msra.mxu0 %v426
  %455 = vmatprep.subr.mxu0 0.0
  %456 = vmatpush1.msra.mxu0 %v418
  %457 = vmatprep.subr.mxu0 0.0
  %458 = vmatpush1.msra.mxu0 %v428
  %459 = vmatprep.subr.mxu0 0.0
  %460 = vmatpush1.msra.mxu0 %v430
  %461 = vmatprep.subr.mxu0 0.0
  %462 = vmatpush1.msra.mxu0 %v432
  %463 = vmatprep.subr.mxu0 0.0
  %464 = vmatpush1.msra.mxu0 %v434
  %465 = vmatprep.subr.mxu0 0.0
  %466 = vmatpush1.msra.mxu0 0.0
  %467 = vmatprep.subr.mxu0 0.0
  %468 = vmatpush1.msra.mxu0 0.0
  %469 = vmatprep.subr.mxu0 0.0
  %470 = vmatpush1.msra.mxu0 0.0
  %471 = vmatprep.subr.mxu0 0.0
  %472 = vmatpush1.msra.mxu0 0.0
  %473 = vmatprep.subr.mxu0 0.0
  %474 = vmatpush1.msra.mxu0 0.0
  %475 = vmatprep.subr.mxu0 0.0
  %476 = vmatpush1.msra.mxu0 0.0
  %477 = vmatprep.subr.mxu0 0.0
  %478 = vmatpush1.msra.mxu0 0.0
  %479 = vmatprep.subr.mxu0 0.0
  %480 = vmatpush1.msra.mxu0 0.0
  %481 = vmatprep.subr.mxu0 0.0
  %482 = vmatpush1.msra.mxu0 0.0
  %483 = vmatprep.subr.mxu0 0.0
  %484 = vmatpush1.msra.mxu0 0.0
  %485 = vmatprep.subr.mxu0 0.0
  %486 = vmatpush1.msra.mxu0 0.0
  %487 = vmatprep.subr.mxu0 0.0
  %488 = vmatpush1.msra.mxu0 0.0
  %489 = vmatprep.subr.mxu0 0.0
  %490 = vmatpush1.msra.mxu0 0.0
  %491 = vmatprep.subr.mxu0 0.0
  %492 = vmatpush1.msra.mxu0 0.0
  %493 = vmatprep.subr.mxu0 0.0
  %494 = vmatpush1.msra.mxu0 0.0
  %495 = vmatprep.subr.mxu0 0.0
  %496 = vmatpush1.msra.mxu0 0.0
  %497 = vmatprep.subr.mxu0 0.0
  %498 = vmatpush1.msra.mxu0 0.0
  %499 = vmatprep.subr.mxu0 0.0
  %500 = vmatpush1.msra.mxu0 0.0
  %501 = vmatprep.subr.mxu0 0.0
  %502 = vmatpush1.msra.mxu0 0.0
  %503 = vmatprep.subr.mxu0 0.0
  %504 = vmatpush1.msra.mxu0 0.0
  %505 = vmatprep.subr.mxu0 0.0
  %506 = vmatpush1.msra.mxu0 0.0
  %507 = vmatprep.subr.mxu0 0.0
  %508 = vmatpush1.msra.mxu0 0.0
  %509 = vmatprep.subr.mxu0 0.0
  %510 = vmatpush1.msra.mxu0 0.0
  %511 = vmatprep.mubr.f32.mxu0 0.0
  %512 = vmatmul.mubr.f32.gmra.mrb[0].mxu0 %v445
  %v513 = vpop.f32.mrb[0].mxu0
  %v514 = vadd.f32 %v442, %v513
  %v515 = vpop.f32.mrb[0].mxu0
  %516 = vdwg.mxu0
  %v517 = vmax.f32 %v514, 0.0
  %v518 = vsel %vm22, %v517, 0.0
  %519 = vrot.lane.b32.xlu0 %v518, 127
  %v520 = vpop.permute.xlu0 %519
  %v521 = vmax.f32 %v518, %v520
  %v522 = vsel %vm22, %v521, 0.0
  %523 = vrot.lane.b32.xlu0 %v522, 4
  %v524 = vpop.permute.xlu0 %523
  %525 = vrot.lane.b32.xlu0 %v522, 3
  %v526 = vpop.permute.xlu0 %525
  %527 = vrot.lane.b32.xlu0 %v522, 2
  %v528 = vpop.permute.xlu0 %527
  %529 = vrot.lane.b32.xlu0 %v522, 1
  %v530 = vpop.permute.xlu0 %529
  %531 = vrot.lane.b32.xlu0 %v522, 127
  %v532 = vpop.permute.xlu0 %531
  %533 = vrot.lane.b32.xlu0 %v522, 126
  %v534 = vpop.permute.xlu0 %533
  %535 = vrot.lane.b32.xlu0 %v522, 125
  %v536 = vpop.permute.xlu0 %535
  %537 = vrot.lane.b32.xlu0 %v522, 124
  %v538 = vpop.permute.xlu0 %537
  %s539 = scalar_lea.vmem %s1, 32
  %v540 = vld [vmem:[%s539] sm:$0xff]
  %s541 = scalar_lea.vmem %s2, 32
  %v542 = vld [vmem:[%s541] sm:$0xff]
  %544 = vset.pattern.permute.xlu0 0
  %545 = vperm.xlu0 %544, %v542
  %v546 = vpop.permute.xlu0 %545
  %v549 = vsel %vm47, %v540, 0
  %551 = vmatprep.subr.mxu0 0.0
  %552 = vmatpush1.msra.mxu0 %v524
  %553 = vmatprep.subr.mxu0 0.0
  %554 = vmatpush1.msra.mxu0 %v526
  %555 = vmatprep.subr.mxu0 0.0
  %556 = vmatpush1.msra.mxu0 %v528
  %557 = vmatprep.subr.mxu0 0.0
  %558 = vmatpush1.msra.mxu0 %v530
  %559 = vmatprep.subr.mxu0 0.0
  %560 = vmatpush1.msra.mxu0 %v522
  %561 = vmatprep.subr.mxu0 0.0
  %562 = vmatpush1.msra.mxu0 %v532
  %563 = vmatprep.subr.mxu0 0.0
  %564 = vmatpush1.msra.mxu0 %v534
  %565 = vmatprep.subr.mxu0 0.0
  %566 = vmatpush1.msra.mxu0 %v536
  %567 = vmatprep.subr.mxu0 0.0
  %568 = vmatpush1.msra.mxu0 %v538
  %569 = vmatprep.subr.mxu0 0.0
  %570 = vmatpush1.msra.mxu0 0.0
  %571 = vmatprep.subr.mxu0 0.0
  %572 = vmatpush1.msra.mxu0 0.0
  %573 = vmatprep.subr.mxu0 0.0
  %574 = vmatpush1.msra.mxu0 0.0
  %575 = vmatprep.subr.mxu0 0.0
  %576 = vmatpush1.msra.mxu0 0.0
  %577 = vmatprep.subr.mxu0 0.0
  %578 = vmatpush1.msra.mxu0 0.0
  %579 = vmatprep.subr.mxu0 0.0
  %580 = vmatpush1.msra.mxu0 0.0
  %581 = vmatprep.subr.mxu0 0.0
  %582 = vmatpush1.msra.mxu0 0.0
  %583 = vmatprep.subr.mxu0 0.0
  %584 = vmatpush1.msra.mxu0 0.0
  %585 = vmatprep.subr.mxu0 0.0
  %586 = vmatpush1.msra.mxu0 0.0
  %587 = vmatprep.subr.mxu0 0.0
  %588 = vmatpush1.msra.mxu0 0.0
  %589 = vmatprep.subr.mxu0 0.0
  %590 = vmatpush1.msra.mxu0 0.0
  %591 = vmatprep.subr.mxu0 0.0
  %592 = vmatpush1.msra.mxu0 0.0
  %593 = vmatprep.subr.mxu0 0.0
  %594 = vmatpush1.msra.mxu0 0.0
  %595 = vmatprep.subr.mxu0 0.0
  %596 = vmatpush1.msra.mxu0 0.0
  %597 = vmatprep.subr.mxu0 0.0
  %598 = vmatpush1.msra.mxu0 0.0
  %599 = vmatprep.subr.mxu0 0.0
  %600 = vmatpush1.msra.mxu0 0.0
  %601 = vmatprep.subr.mxu0 0.0
  %602 = vmatpush1.msra.mxu0 0.0
  %603 = vmatprep.subr.mxu0 0.0
  %604 = vmatpush1.msra.mxu0 0.0
  %605 = vmatprep.subr.mxu0 0.0
  %606 = vmatpush1.msra.mxu0 0.0
  %607 = vmatprep.subr.mxu0 0.0
  %608 = vmatpush1.msra.mxu0 0.0
  %609 = vmatprep.subr.mxu0 0.0
  %610 = vmatpush1.msra.mxu0 0.0
  %611 = vmatprep.subr.mxu0 0.0
  %612 = vmatpush1.msra.mxu0 0.0
  %613 = vmatprep.subr.mxu0 0.0
  %614 = vmatpush1.msra.mxu0 0.0
  %615 = vmatprep.mubr.f32.mxu0 0.0
  %616 = vmatmul.mubr.f32.gmra.mrb[0].mxu0 %v549
  %v617 = vpop.f32.mrb[0].mxu0
  %v618 = vadd.f32 %v546, %v617
  %v619 = vpop.f32.mrb[0].mxu0
  %620 = vdwg.mxu0
  %v621 = vmax.f32 %v618, 0.0
  %v622 = vsel %vm22, %v621, 0.0
  %623 = vrot.lane.b32.xlu0 %v622, 127
  %v624 = vpop.permute.xlu0 %623
  %v625 = vmax.f32 %v622, %v624
  %v626 = vsel %vm22, %v625, 0.0
  %627 = vrot.lane.b32.xlu0 %v626, 4
  %v628 = vpop.permute.xlu0 %627
  %629 = vrot.lane.b32.xlu0 %v626, 3
  %v630 = vpop.permute.xlu0 %629
  %631 = vrot.lane.b32.xlu0 %v626, 2
  %v632 = vpop.permute.xlu0 %631
  %633 = vrot.lane.b32.xlu0 %v626, 1
  %v634 = vpop.permute.xlu0 %633
  %635 = vrot.lane.b32.xlu0 %v626, 127
  %v636 = vpop.permute.xlu0 %635
  %637 = vrot.lane.b32.xlu0 %v626, 126
  %v638 = vpop.permute.xlu0 %637
  %639 = vrot.lane.b32.xlu0 %v626, 125
  %v640 = vpop.permute.xlu0 %639
  %641 = vrot.lane.b32.xlu0 %v626, 124
  %v642 = vpop.permute.xlu0 %641
  %s643 = scalar_lea.vmem %s1, 40
  %v644 = vld [vmem:[%s643] sm:$0xff]
  %s645 = scalar_lea.vmem %s2, 40
  %v646 = vld [vmem:[%s645] sm:$0xff]
  %648 = vset.pattern.permute.xlu0 0
  %649 = vperm.xlu0 %648, %v646
  %v650 = vpop.permute.xlu0 %649
  %v653 = vsel %vm47, %v644, 0
  %655 = vmatprep.subr.mxu0 0.0
  %656 = vmatpush1.msra.mxu0 %v628
  %657 = vmatprep.subr.mxu0 0.0
  %658 = vmatpush1.msra.mxu0 %v630
  %659 = vmatprep.subr.mxu0 0.0
  %660 = vmatpush1.msra.mxu0 %v632
  %661 = vmatprep.subr.mxu0 0.0
  %662 = vmatpush1.msra.mxu0 %v634
  %663 = vmatprep.subr.mxu0 0.0
  %664 = vmatpush1.msra.mxu0 %v626
  %665 = vmatprep.subr.mxu0 0.0
  %666 = vmatpush1.msra.mxu0 %v636
  %667 = vmatprep.subr.mxu0 0.0
  %668 = vmatpush1.msra.mxu0 %v638
  %669 = vmatprep.subr.mxu0 0.0
  %670 = vmatpush1.msra.mxu0 %v640
  %671 = vmatprep.subr.mxu0 0.0
  %672 = vmatpush1.msra.mxu0 %v642
  %673 = vmatprep.subr.mxu0 0.0
  %674 = vmatpush1.msra.mxu0 0.0
  %675 = vmatprep.subr.mxu0 0.0
  %676 = vmatpush1.msra.mxu0 0.0
  %677 = vmatprep.subr.mxu0 0.0
  %678 = vmatpush1.msra.mxu0 0.0
  %679 = vmatprep.subr.mxu0 0.0
  %680 = vmatpush1.msra.mxu0 0.0
  %681 = vmatprep.subr.mxu0 0.0
  %682 = vmatpush1.msra.mxu0 0.0
  %683 = vmatprep.subr.mxu0 0.0
  %684 = vmatpush1.msra.mxu0 0.0
  %685 = vmatprep.subr.mxu0 0.0
  %686 = vmatpush1.msra.mxu0 0.0
  %687 = vmatprep.subr.mxu0 0.0
  %688 = vmatpush1.msra.mxu0 0.0
  %689 = vmatprep.subr.mxu0 0.0
  %690 = vmatpush1.msra.mxu0 0.0
  %691 = vmatprep.subr.mxu0 0.0
  %692 = vmatpush1.msra.mxu0 0.0
  %693 = vmatprep.subr.mxu0 0.0
  %694 = vmatpush1.msra.mxu0 0.0
  %695 = vmatprep.subr.mxu0 0.0
  %696 = vmatpush1.msra.mxu0 0.0
  %697 = vmatprep.subr.mxu0 0.0
  %698 = vmatpush1.msra.mxu0 0.0
  %699 = vmatprep.subr.mxu0 0.0
  %700 = vmatpush1.msra.mxu0 0.0
  %701 = vmatprep.subr.mxu0 0.0
  %702 = vmatpush1.msra.mxu0 0.0
  %703 = vmatprep.subr.mxu0 0.0
  %704 = vmatpush1.msra.mxu0 0.0
  %705 = vmatprep.subr.mxu0 0.0
  %706 = vmatpush1.msra.mxu0 0.0
  %707 = vmatprep.subr.mxu0 0.0
  %708 = vmatpush1.msra.mxu0 0.0
  %709 = vmatprep.subr.mxu0 0.0
  %710 = vmatpush1.msra.mxu0 0.0
  %711 = vmatprep.subr.mxu0 0.0
  %712 = vmatpush1.msra.mxu0 0.0
  %713 = vmatprep.subr.mxu0 0.0
  %714 = vmatpush1.msra.mxu0 0.0
  %715 = vmatprep.subr.mxu0 0.0
  %716 = vmatpush1.msra.mxu0 0.0
  %717 = vmatprep.subr.mxu0 0.0
  %718 = vmatpush1.msra.mxu0 0.0
  %719 = vmatprep.mubr.f32.mxu0 0.0
  %720 = vmatmul.mubr.f32.gmra.mrb[0].mxu0 %v653
  %v721 = vpop.f32.mrb[0].mxu0
  %v722 = vadd.f32 %v650, %v721
  %v723 = vpop.f32.mrb[0].mxu0
  %724 = vdwg.mxu0
  %v725 = vmax.f32 %v722, 0.0
  %v726 = vsel %vm22, %v725, 0.0
  %727 = vrot.lane.b32.xlu0 %v726, 127
  %v728 = vpop.permute.xlu0 %727
  %v729 = vmax.f32 %v726, %v728
  %s730 = scalar_lea.vmem %s1, 56
  %v731 = vld [vmem:[%s730] sm:$0xff]
  %s732 = scalar_lea.vmem %s2, 56
  %v733 = vld [vmem:[%s732] sm:$0xff]
  %735 = vset.pattern.permute.xlu0 0
  %736 = vperm.xlu0 %735, %v733
  %v737 = vpop.permute.xlu0 %736
  %v740 = vsel %vm47, %v731, 0
  %742 = vmatprep.subr.mxu0 0.0
  %743 = vmatpush1.msra.mxu0 %v420
  %744 = vmatprep.subr.mxu0 0.0
  %745 = vmatpush1.msra.mxu0 %v422
  %746 = vmatprep.subr.mxu0 0.0
  %747 = vmatpush1.msra.mxu0 %v424
  %748 = vmatprep.subr.mxu0 0.0
  %749 = vmatpush1.msra.mxu0 %v426
  %750 = vmatprep.subr.mxu0 0.0
  %751 = vmatpush1.msra.mxu0 %v418
  %752 = vmatprep.subr.mxu0 0.0
  %753 = vmatpush1.msra.mxu0 %v428
  %754 = vmatprep.subr.mxu0 0.0
  %755 = vmatpush1.msra.mxu0 %v430
  %756 = vmatprep.subr.mxu0 0.0
  %757 = vmatpush1.msra.mxu0 %v432
  %758 = vmatprep.subr.mxu0 0.0
  %759 = vmatpush1.msra.mxu0 %v434
  %760 = vmatprep.subr.mxu0 0.0
  %761 = vmatpush1.msra.mxu0 0.0
  %762 = vmatprep.subr.mxu0 0.0
  %763 = vmatpush1.msra.mxu0 0.0
  %764 = vmatprep.subr.mxu0 0.0
  %765 = vmatpush1.msra.mxu0 0.0
  %766 = vmatprep.subr.mxu0 0.0
  %767 = vmatpush1.msra.mxu0 0.0
  %768 = vmatprep.subr.mxu0 0.0
  %769 = vmatpush1.msra.mxu0 0.0
  %770 = vmatprep.subr.mxu0 0.0
  %771 = vmatpush1.msra.mxu0 0.0
  %772 = vmatprep.subr.mxu0 0.0
  %773 = vmatpush1.msra.mxu0 0.0
  %774 = vmatprep.subr.mxu0 0.0
  %775 = vmatpush1.msra.mxu0 0.0
  %776 = vmatprep.subr.mxu0 0.0
  %777 = vmatpush1.msra.mxu0 0.0
  %778 = vmatprep.subr.mxu0 0.0
  %779 = vmatpush1.msra.mxu0 0.0
  %780 = vmatprep.subr.mxu0 0.0
  %781 = vmatpush1.msra.mxu0 0.0
  %782 = vmatprep.subr.mxu0 0.0
  %783 = vmatpush1.msra.mxu0 0.0
  %784 = vmatprep.subr.mxu0 0.0
  %785 = vmatpush1.msra.mxu0 0.0
  %786 = vmatprep.subr.mxu0 0.0
  %787 = vmatpush1.msra.mxu0 0.0
  %788 = vmatprep.subr.mxu0 0.0
  %789 = vmatpush1.msra.mxu0 0.0
  %790 = vmatprep.subr.mxu0 0.0
  %791 = vmatpush1.msra.mxu0 0.0
  %792 = vmatprep.subr.mxu0 0.0
  %793 = vmatpush1.msra.mxu0 0.0
  %794 = vmatprep.subr.mxu0 0.0
  %795 = vmatpush1.msra.mxu0 0.0
  %796 = vmatprep.subr.mxu0 0.0
  %797 = vmatpush1.msra.mxu0 0.0
  %798 = vmatprep.subr.mxu0 0.0
  %799 = vmatpush1.msra.mxu0 0.0
  %800 = vmatprep.subr.mxu0 0.0
  %801 = vmatpush1.msra.mxu0 0.0
  %802 = vmatprep.subr.mxu0 0.0
  %803 = vmatpush1.msra.mxu0 0.0
  %804 = vmatprep.subr.mxu0 0.0
  %805 = vmatpush1.msra.mxu0 0.0
  %806 = vmatprep.mubr.f32.mxu0 0.0
  %807 = vmatmul.mubr.f32.gmra.mrb[0].mxu0 %v740
  %v808 = vpop.f32.mrb[0].mxu0
  %v809 = vadd.f32 %v737, %v808
  %v810 = vpop.f32.mrb[0].mxu0
  %811 = vdwg.mxu0
  %v812 = vadd.f32 %v729, %v809
  %v813 = vmax.f32 %v812, 0.0
  %v814 = vsel %vm22, %v813, 0.0
  %815 = vrot.lane.b32.xlu0 %v814, 127
  %v816 = vpop.permute.xlu0 %815
  %v817 = vadd.f32 %v814, %v816
  %v818 = vmul.f32 %v817, 0.5
  %s819 = scalar_lea.vmem %s1, 64
  %v820 = vld [vmem:[%s819] sm:$0xff]
  %s821 = scalar_lea.vmem %s2, 64
  %v822 = vld [vmem:[%s821] sm:$0xff]
  %824 = vset.pattern.permute.xlu0 0
  %825 = vperm.xlu0 %824, %v822
  %v826 = vpop.permute.xlu0 %825
  %vm828 = vcmask 64512
  %v830 = vsel %vm828, %v820, 0
  %832 = vmatprep.subr.mxu0 0.0
  %833 = vmatpush1.msra.mxu0 %v818
  %834 = vmatprep.subr.mxu0 0.0
  %835 = vmatpush1.msra.mxu0 0.0
  %836 = vmatprep.subr.mxu0 0.0
  %837 = vmatpush1.msra.mxu0 0.0
  %838 = vmatprep.subr.mxu0 0.0
  %839 = vmatpush1.msra.mxu0 0.0
  %840 = vmatprep.subr.mxu0 0.0
  %841 = vmatpush1.msra.mxu0 0.0
  %842 = vmatprep.subr.mxu0 0.0
  %843 = vmatpush1.msra.mxu0 0.0
  %844 = vmatprep.subr.mxu0 0.0
  %845 = vmatpush1.msra.mxu0 0.0
  %846 = vmatprep.subr.mxu0 0.0
  %847 = vmatpush1.msra.mxu0 0.0
  %848 = vmatprep.subr.mxu0 0.0
  %849 = vmatpush1.msra.mxu0 0.0
  %850 = vmatprep.subr.mxu0 0.0
  %851 = vmatpush1.msra.mxu0 0.0
  %852 = vmatprep.subr.mxu0 0.0
  %853 = vmatpush1.msra.mxu0 0.0
  %854 = vmatprep.subr.mxu0 0.0
  %855 = vmatpush1.msra.mxu0 0.0
  %856 = vmatprep.subr.mxu0 0.0
  %857 = vmatpush1.msra.mxu0 0.0
  %858 = vmatprep.subr.mxu0 0.0
  %859 = vmatpush1.msra.mxu0 0.0
  %860 = vmatprep.subr.mxu0 0.0
  %861 = vmatpush1.msra.mxu0 0.0
  %862 = vmatprep.subr.mxu0 0.0
  %863 = vmatpush1.msra.mxu0 0.0
  %864 = vmatprep.subr.mxu0 0.0
  %865 = vmatpush1.msra.mxu0 0.0
  %866 = vmatprep.subr.mxu0 0.0
  %867 = vmatpush1.msra.mxu0 0.0
  %868 = vmatprep.subr.mxu0 0.0
  %869 = vmatpush1.msra.mxu0 0.0
  %870 = vmatprep.subr.mxu0 0.0
  %871 = vmatpush1.msra.mxu0 0.0
  %872 = vmatprep.subr.mxu0 0.0
  %873 = vmatpush1.msra.mxu0 0.0
  %874 = vmatprep.subr.mxu0 0.0
  %875 = vmatpush1.msra.mxu0 0.0
  %876 = vmatprep.subr.mxu0 0.0
  %877 = vmatpush1.msra.mxu0 0.0
  %878 = vmatprep.subr.mxu0 0.0
  %879 = vmatpush1.msra.mxu0 0.0
  %880 = vmatprep.subr.mxu0 0.0
  %881 = vmatpush1.msra.mxu0 0.0
  %882 = vmatprep.subr.mxu0 0.0
  %883 = vmatpush1.msra.mxu0 0.0
  %884 = vmatprep.subr.mxu0 0.0
  %885 = vmatpush1.msra.mxu0 0.0
  %886 = vmatprep.subr.mxu0 0.0
  %887 = vmatpush1.msra.mxu0 0.0
  %888 = vmatprep.subr.mxu0 0.0
  %889 = vmatpush1.msra.mxu0 0.0
  %890 = vmatprep.subr.mxu0 0.0
  %891 = vmatpush1.msra.mxu0 0.0
  %892 = vmatprep.subr.mxu0 0.0
  %893 = vmatpush1.msra.mxu0 0.0
  %894 = vmatprep.subr.mxu0 0.0
  %895 = vmatpush1.msra.mxu0 0.0
  %896 = vmatprep.mubr.f32.mxu0 0.0
  %897 = vmatmul.mubr.f32.gmra.mrb[0].mxu0 %v830
  %v898 = vpop.f32.mrb[0].mxu0
  %v899 = vadd.f32 %v826, %v898
  %v900 = vpop.f32.mrb[0].mxu0
  %901 = vdwg.mxu0
  %v902 = vmax.f32 %v899, 0.0
  %v903 = vsel %vm22, %v902, 0.0
  %904 = vrot.lane.b32.xlu0 %v903, 127
  %v905 = vpop.permute.xlu0 %904
  %v906 = vmax.f32 %v903, %v905
  %v907 = vld [vmem:[%s3] sm:$0xff]
  %v908 = vld [vmem:[%s3 + $0x8] sm:$0xff]
  %v909 = vld [vmem:[%s3 + $0x10] sm:$0xff]
  %v910 = vld [vmem:[%s3 + $0x18] sm:$0xff]
  %v911 = vld [vmem:[%s3 + $0x20] sm:$0xff]
  %v912 = vld [vmem:[%s3 + $0x28] sm:$0xff]
  %v913 = vld [vmem:[%s3 + $0x30] sm:$0xff]
  %v914 = vld [vmem:[%s3 + $0x38] sm:$0xff]
  %v915 = vld [vmem:[%s3 + $0x40] sm:$0xff]
  %v916 = vld [vmem:[%s3 + $0x48] sm:$0xff]
  %v917 = vld [vmem:[%s3 + $0x50] sm:$0xff]
  %v918 = vld [vmem:[%s3 + $0x58] sm:$0xff]
  %v919 = vld [vmem:[%s3 + $0x60] sm:$0xff]
  %v920 = vld [vmem:[%s3 + $0x68] sm:$0xff]
  %v921 = vld [vmem:[%s3 + $0x70] sm:$0xff]
  %v922 = vld [vmem:[%s3 + $0x78] sm:$0xff]
  %923 = vmatprep.subr.mxu0 0.0
  %924 = vmatpush1.msra.mxu0 %v907
  %925 = vmatprep.subr.mxu0 0.0
  %926 = vmatpush1.msra.mxu0 %v908
  %927 = vmatprep.subr.mxu0 0.0
  %928 = vmatpush1.msra.mxu0 %v909
  %929 = vmatprep.subr.mxu0 0.0
  %930 = vmatpush1.msra.mxu0 %v910
  %931 = vmatprep.subr.mxu0 0.0
  %932 = vmatpush1.msra.mxu0 %v911
  %933 = vmatprep.subr.mxu0 0.0
  %934 = vmatpush1.msra.mxu0 %v912
  %935 = vmatprep.subr.mxu0 0.0
  %936 = vmatpush1.msra.mxu0 %v913
  %937 = vmatprep.subr.mxu0 0.0
  %938 = vmatpush1.msra.mxu0 %v914
  %939 = vmatprep.subr.mxu0 0.0
  %940 = vmatpush1.msra.mxu0 %v915
  %941 = vmatprep.subr.mxu0 0.0
  %942 = vmatpush1.msra.mxu0 %v916
  %943 = vmatprep.subr.mxu0 0.0
  %944 = vmatpush1.msra.mxu0 %v917
  %945 = vmatprep.subr.mxu0 0.0
  %946 = vmatpush1.msra.mxu0 %v918
  %947 = vmatprep.subr.mxu0 0.0
  %948 = vmatpush1.msra.mxu0 %v919
  %949 = vmatprep.subr.mxu0 0.0
  %950 = vmatpush1.msra.mxu0 %v920
  %951 = vmatprep.subr.mxu0 0.0
  %952 = vmatpush1.msra.mxu0 %v921
  %953 = vmatprep.subr.mxu0 0.0
  %954 = vmatpush1.msra.mxu0 %v922
  %955 = vmatprep.subr.mxu0 0.0
  %956 = vmatpush1.msra.mxu0 0.0
  %957 = vmatprep.subr.mxu0 0.0
  %958 = vmatpush1.msra.mxu0 0.0
  %959 = vmatprep.subr.mxu0 0.0
  %960 = vmatpush1.msra.mxu0 0.0
  %961 = vmatprep.subr.mxu0 0.0
  %962 = vmatpush1.msra.mxu0 0.0
  %963 = vmatprep.subr.mxu0 0.0
  %964 = vmatpush1.msra.mxu0 0.0
  %965 = vmatprep.subr.mxu0 0.0
  %966 = vmatpush1.msra.mxu0 0.0
  %967 = vmatprep.subr.mxu0 0.0
  %968 = vmatpush1.msra.mxu0 0.0
  %969 = vmatprep.subr.mxu0 0.0
  %970 = vmatpush1.msra.mxu0 0.0
  %971 = vmatprep.subr.mxu0 0.0
  %972 = vmatpush1.msra.mxu0 0.0
  %973 = vmatprep.subr.mxu0 0.0
  %974 = vmatpush1.msra.mxu0 0.0
  %975 = vmatprep.subr.mxu0 0.0
  %976 = vmatpush1.msra.mxu0 0.0
  %977 = vmatprep.subr.mxu0 0.0
  %978 = vmatpush1.msra.mxu0 0.0
  %979 = vmatprep.subr.mxu0 0.0
  %980 = vmatpush1.msra.mxu0 0.0
  %981 = vmatprep.subr.mxu0 0.0
  %982 = vmatpush1.msra.mxu0 0.0
  %983 = vmatprep.subr.mxu0 0.0
  %984 = vmatpush1.msra.mxu0 0.0
  %985 = vmatprep.subr.mxu0 0.0
  %986 = vmatpush1.msra.mxu0 0.0
  %987 = vmatprep.mubr.f32.mxu0 0.0
  %988 = vmatmul.mubr.f32.gmra.mrb[0].mxu0 %v906
  %v989 = vpop.f32.mrb[0].mxu0
  %v990 = vadd.f32 0.0, %v989
  %v991 = vpop.f32.mrb[0].mxu0
  %992 = vdwg.mxu0
  %vm993 = vcmask 15360
  %994 = vst.msk [vmem:[%s4] sm:$0xff] %vm993, %v990
  // Predicated region
  $region18: #{_forward_impl.1} parent=0 // pred_check
    _
  $region19: #{_forward_impl.1} parent=0 // pred_check_branch
    %996 = sbr.rel (0) target = $region21
  $region20: #{_forward_impl.1} parent=0 // pred_region
    _
  $region21: #{_forward_impl.1} parent=0 // pred_fallthru
    _
  // Predicated region
  $region22: #{_forward_impl.1} parent=0 // pred_check
    _
  $region23: #{_forward_impl.1} parent=0 // pred_check_branch
    %998 = sbr.rel (0) target = $region25
  $region24: #{_forward_impl.1} parent=0 // pred_region
    _
  $region25: #{_forward_impl.1} parent=0 // pred_fallthru
    _

</llo_original>
